<compile_context>
chip_gen: v7x
topology: tpu7x:2x2x1
jax: 0.10.0
libtpu: 0.0.40
codegen_flags: <defaults>
</compile_context>

<pallas_src>
import functools

import numpy as np
import jax
import jax.numpy as jnp
from jax import lax
from jax.experimental import pallas as pl
from jax.experimental.pallas import tpu as pltpu


def _decoder_kernel(x_ref, w2_ref, b_ref, g_ref, bt_ref, mask_ref, o_ref, *,
                    taps, eps, neg_slope, cnt):
    """Whole-problem kernel.

    x_ref    : (Cin, FLAT)        flattened, zero-padded input (all images)
    w2_ref   : (PH, Cout, Q*Cin)  per-phase sub-kernel weight columns
    b_ref    : (1, Cout, 1)       transposed-conv bias
    g_ref    : (1, Cout, 1)       BN weight (gamma)
    bt_ref   : (1, Cout, 1)       BN bias (beta)
    mask_ref : (PH, 1, LP)        1.0 at lanes holding real output pixels
    o_ref    : (PH, Cout, LP)     lane-dense output slab (LP % 128 == 0)
    """
    PH, Cout, LP = o_ref.shape

    # ---- transposed convolution: unrolled VPU outer-product accumulation ----
    # Each column is one (sub-kernel shift, input channel) pair; the shifted
    # input row is a contiguous lane window of x_ref (no strided sub-slices).
    acc = jnp.zeros((PH, Cout, LP), jnp.float32)
    for col, (ci, off) in enumerate(taps):
        row = x_ref[pl.ds(ci, 1), pl.ds(off, LP)]        # (1, LP)
        wcol = w2_ref[:, :, pl.ds(col, 1)]               # (PH, Cout, 1)
        acc = acc + row[None, :, :] * wcol
    z = acc + b_ref[...]

    # ---- BatchNorm2d, training-mode batch statistics (one pass) ----
    m = mask_ref[...]                                    # valid-output mask
    zm = z * m
    inv_cnt = jnp.float32(1.0 / cnt)
    mean = jnp.sum(jnp.sum(zm, axis=2, keepdims=True),
                   axis=0, keepdims=True) * inv_cnt       # (1, Cout, 1)
    ex2 = jnp.sum(jnp.sum(zm * z, axis=2, keepdims=True),
                  axis=0, keepdims=True) * inv_cnt        # E[z^2] over valid
    var = ex2 - mean * mean
    scale = lax.rsqrt(var + eps) * g_ref[...]
    shift = bt_ref[...] - mean * scale
    y = z * scale + shift

    # ---- LeakyReLU (negative_slope = 0.01, PyTorch default) ----
    o_ref[...] = jnp.where(y >= 0, y, neg_slope * y)


def _ceil_div(a, b):
    return -(-a // b)


def decoder_forward(x_nchw, w_tconv, b_tconv, gamma, beta, *,
                    stride, padding, eps=1e-5, neg_slope=0.01):
    """x_nchw: (N, Cin, H, W); w_tconv: (Cin, Cout, kH, kW) (PyTorch layouts)."""
    # TODO(synk): ConvTranspose2d output_padding is not modeled (module default 0).
    N, Cin, H, W = x_nchw.shape
    Cin_w, Cout, kH, kW = w_tconv.shape
    assert Cin == Cin_w
    sH, sW = stride
    pH, pW = padding
    Hout = (H - 1) * sH - 2 * pH + kH
    Wout = (W - 1) * sW - 2 * pW + kW

    # --- static stride-phase bookkeeping --------------------------------
    jh = (kH - 1) // sH                         # max vertical sub-kernel shift
    jw = (kW - 1) // sW                         # max horizontal sub-kernel shift
    qh_lo = [max(0, _ceil_div(pH - r, sH)) for r in range(sH)]
    qh_hi = [(Hout - 1 + pH - r) // sH for r in range(sH)]
    qw_lo = [max(0, _ceil_div(pW - r, sW)) for r in range(sW)]
    qw_hi = [(Wout - 1 + pW - r) // sW for r in range(sW)]

    padT, padB = jh, max(0, max(qh_hi) - (H - 1))
    padL, padR = jw, max(0, max(qw_hi) - (W - 1))
    HP, WP = padT + H + padB, padL + W + padR
    P = HP * WP
    NP = N * P
    LP = _ceil_div(NP, 128) * 128               # lane-dense slab width
    smax = jh * WP + jw
    FLAT = smax + LP
    PH = sH * sW                                # number of output phases
    Q = (jh + 1) * (jw + 1)                     # sub-kernel taps per phase (max)

    # --- input: NCHW -> (Cin, flattened zero-padded spatial of all images) ---
    xt = jnp.transpose(x_nchw, (1, 0, 2, 3)).astype(jnp.float32)   # (Cin,N,H,W)
    xp = jnp.pad(xt, ((0, 0), (0, 0), (padT, padB), (padL, padR)))
    X = jnp.pad(xp.reshape(Cin, NP), ((0, 0), (smax, FLAT - smax - NP)))

    # --- per-phase sub-kernel weight columns (PH, Cout, Q*Cin) ---------------
    sel = np.zeros((PH, Q, kH, kW), np.float32)
    for rh in range(sH):
        for rw in range(sW):
            ph = rh * sW + rw
            for j in range(jh + 1):
                for l in range(jw + 1):
                    kh, kw = rh + sH * j, rw + sW * l
                    if kh < kH and kw < kW:
                        sel[ph, j * (jw + 1) + l, kh, kw] = 1.0
    W2 = jnp.einsum('pqhw,iohw->poqi', jnp.asarray(sel),
                    w_tconv.astype(jnp.float32)).reshape(PH, Cout, Q * Cin)

    # (input channel, lane offset into X) per weight column, same ordering.
    taps = tuple((ci, smax - (j * WP + l))
                 for j in range(jh + 1) for l in range(jw + 1)
                 for ci in range(Cin))

    # --- mask marking lanes that hold real output pixels (for BN stats) ------
    mask_np = np.zeros((PH, 1, LP), np.float32)
    for rh in range(sH):
        for rw in range(sW):
            ph = rh * sW + rw
            lo, hi = qw_lo[rw], qw_hi[rw]
            if hi < lo or qh_hi[rh] < qh_lo[rh]:
                continue
            for n in range(N):
                for qh in range(qh_lo[rh], qh_hi[rh] + 1):
                    base = n * P + (qh + padT) * WP + padL
                    mask_np[ph, 0, base + lo: base + hi + 1] = 1.0
    cnt = int(mask_np.sum())
    assert cnt == N * Hout * Wout
    mask = jnp.asarray(mask_np)

    bias = b_tconv.reshape(1, Cout, 1).astype(jnp.float32)
    g = gamma.reshape(1, Cout, 1).astype(jnp.float32)
    bt = beta.reshape(1, Cout, 1).astype(jnp.float32)

    kernel = functools.partial(
        _decoder_kernel, taps=taps, eps=float(eps),
        neg_slope=float(neg_slope), cnt=float(cnt))

    flops = 2 * N * Hout * Wout * Cout * kH * kW * Cin \
        + 8 * N * Hout * Wout * Cout
    bytes_accessed = 4 * (Cin * FLAT + PH * Cout * Q * Cin + PH * LP
                          + 3 * Cout + PH * Cout * LP)
    vmem = pl.BlockSpec(memory_space=pltpu.MemorySpace.VMEM)
    slab = pl.pallas_call(
        kernel,
        out_shape=jax.ShapeDtypeStruct((PH, Cout, LP), jnp.float32),
        in_specs=[vmem] * 6,
        out_specs=vmem,
        cost_estimate=pl.CostEstimate(flops=flops, transcendentals=Cout,
                                      bytes_accessed=bytes_accessed),
    )(X, W2, bias, g, bt, mask)

    # --- phase interleave back to PyTorch NCHW (pure layout plumbing) --------
    core = slab[:, :, :NP].reshape(sH, sW, Cout, N, HP, WP)
    core = jnp.transpose(core, (3, 2, 4, 0, 5, 1)).reshape(
        N, Cout, HP * sH, WP * sW)
    h0 = pH + sH * padT
    w0 = pW + sW * padL
    return core[:, :, h0:h0 + Hout, w0:w0 + Wout]


def decoder_reference(x_nchw, w_tconv, b_tconv, gamma, beta, *,
                      stride, padding, eps=1e-5, neg_slope=0.01):
    """Pure-JAX reference (lax dilated conv) mirroring the PyTorch module."""
    Cin, Cout, kH, kW = w_tconv.shape
    sH, sW = stride
    pH, pW = padding
    w_conv = jnp.transpose(w_tconv, (1, 0, 2, 3))[:, :, ::-1, ::-1]
    y = lax.conv_general_dilated(
        x_nchw.astype(jnp.float32), w_conv.astype(jnp.float32),
        window_strides=(1, 1),
        padding=((kH - 1 - pH, kH - 1 - pH), (kW - 1 - pW, kW - 1 - pW)),
        lhs_dilation=(sH, sW), rhs_dilation=(1, 1),
        dimension_numbers=('NCHW', 'OIHW', 'NCHW'),
        precision=lax.Precision.HIGHEST)
    y = y + b_tconv.reshape(1, Cout, 1, 1)
    mean = jnp.mean(y, axis=(0, 2, 3), keepdims=True)
    var = jnp.mean((y - mean) ** 2, axis=(0, 2, 3), keepdims=True)
    y = (y - mean) * lax.rsqrt(var + eps) * gamma.reshape(1, Cout, 1, 1) \
        + beta.reshape(1, Cout, 1, 1)
    return jnp.where(y >= 0, y, neg_slope * y)


if __name__ == "__main__":
    key = jax.random.PRNGKey(0)
    k1, k2, k3, k4, k5 = jax.random.split(key, 5)

    # Decoder(in_channels=4, out_channels=8, kernel_size=(3,3), stride=(2,2),
    #         padding=(1,1), complex=False)
    N, Cin, H, W = 2, 4, 16, 16
    Cout = 8
    kernel_size = (3, 3)
    stride = (2, 2)
    padding = (1, 1)

    x = jax.random.normal(k1, (N, Cin, H, W), jnp.float32)
    w_tconv = 0.1 * jax.random.normal(k2, (Cin, Cout) + kernel_size, jnp.float32)
    b_tconv = 0.1 * jax.random.normal(k3, (Cout,), jnp.float32)
    gamma = 1.0 + 0.1 * jax.random.normal(k4, (Cout,), jnp.float32)
    beta = 0.1 * jax.random.normal(k5, (Cout,), jnp.float32)

    out = decoder_forward(x, w_tconv, b_tconv, gamma, beta,
                          stride=stride, padding=padding)
    out = jax.block_until_ready(out)

    ref = decoder_reference(x, w_tconv, b_tconv, gamma, beta,
                            stride=stride, padding=padding)
    assert out.shape == ref.shape == (N, Cout, 31, 31)
    if not jnp.allclose(out, ref, atol=1e-4, rtol=1e-4):
        raise AssertionError("Pallas Decoder kernel mismatch vs JAX reference")
    print("KERNEL_OK")
</pallas_src>

<mosaic_0001>
module attributes {stable_mosaic.version = 11 : i64} {
  func.func @_decoder_kernel(%arg0: memref<4x658xf32, #tpu.memory_space<vmem>>, %arg1: memref<4x8x16xf32, #tpu.memory_space<vmem>>, %arg2: memref<1x8x1xf32, #tpu.memory_space<vmem>>, %arg3: memref<1x8x1xf32, #tpu.memory_space<vmem>>, %arg4: memref<1x8x1xf32, #tpu.memory_space<vmem>>, %arg5: memref<4x1x640xf32, #tpu.memory_space<vmem>>, %arg6: memref<4x8x640xf32, #tpu.memory_space<vmem>>) attributes {dimension_semantics = [], scalar_prefetch = 0 : i64, scratch_operands = 0 : i64, tpu.core_type = #tpu.core_type<tc>} {
    %cst = arith.constant 0.000000e+00 : f32
    %0 = vector.broadcast %cst : f32 to vector<4x8x640xf32>
    %c0 = arith.constant 0 : index
    %c18 = arith.constant 18 : index
    %1 = vector.load %arg0[%c0, %c18] : memref<4x658xf32, #tpu.memory_space<vmem>>, vector<1x640xf32>
    %c0_0 = arith.constant 0 : index
    %c0_1 = arith.constant 0 : index
    %c0_2 = arith.constant 0 : index
    %2 = vector.load %arg1[%c0_0, %c0_1, %c0_2] : memref<4x8x16xf32, #tpu.memory_space<vmem>>, vector<4x8x1xf32>
    %3 = vector.shape_cast %1 : vector<1x640xf32> to vector<1x1x640xf32>
    %4 = vector.broadcast %3 : vector<1x1x640xf32> to vector<4x8x640xf32>
    %5 = vector.broadcast %2 : vector<4x8x1xf32> to vector<4x8x640xf32>
    %6 = arith.mulf %4, %5 : vector<4x8x640xf32>
    %7 = arith.addf %0, %6 : vector<4x8x640xf32>
    %c1 = arith.constant 1 : index
    %c18_3 = arith.constant 18 : index
    %8 = vector.load %arg0[%c1, %c18_3] : memref<4x658xf32, #tpu.memory_space<vmem>>, vector<1x640xf32>
    %c0_4 = arith.constant 0 : index
    %c0_5 = arith.constant 0 : index
    %c1_6 = arith.constant 1 : index
    %9 = vector.load %arg1[%c0_4, %c0_5, %c1_6] : memref<4x8x16xf32, #tpu.memory_space<vmem>>, vector<4x8x1xf32>
    %10 = vector.shape_cast %8 : vector<1x640xf32> to vector<1x1x640xf32>
    %11 = vector.broadcast %10 : vector<1x1x640xf32> to vector<4x8x640xf32>
    %12 = vector.broadcast %9 : vector<4x8x1xf32> to vector<4x8x640xf32>
    %13 = arith.mulf %11, %12 : vector<4x8x640xf32>
    %14 = arith.addf %7, %13 : vector<4x8x640xf32>
    %c2 = arith.constant 2 : index
    %c18_7 = arith.constant 18 : index
    %15 = vector.load %arg0[%c2, %c18_7] : memref<4x658xf32, #tpu.memory_space<vmem>>, vector<1x640xf32>
    %c0_8 = arith.constant 0 : index
    %c0_9 = arith.constant 0 : index
    %c2_10 = arith.constant 2 : index
    %16 = vector.load %arg1[%c0_8, %c0_9, %c2_10] : memref<4x8x16xf32, #tpu.memory_space<vmem>>, vector<4x8x1xf32>
    %17 = vector.shape_cast %15 : vector<1x640xf32> to vector<1x1x640xf32>
    %18 = vector.broadcast %17 : vector<1x1x640xf32> to vector<4x8x640xf32>
    %19 = vector.broadcast %16 : vector<4x8x1xf32> to vector<4x8x640xf32>
    %20 = arith.mulf %18, %19 : vector<4x8x640xf32>
    %21 = arith.addf %14, %20 : vector<4x8x640xf32>
    %c3 = arith.constant 3 : index
    %c18_11 = arith.constant 18 : index
    %22 = vector.load %arg0[%c3, %c18_11] : memref<4x658xf32, #tpu.memory_space<vmem>>, vector<1x640xf32>
    %c0_12 = arith.constant 0 : index
    %c0_13 = arith.constant 0 : index
    %c3_14 = arith.constant 3 : index
    %23 = vector.load %arg1[%c0_12, %c0_13, %c3_14] : memref<4x8x16xf32, #tpu.memory_space<vmem>>, vector<4x8x1xf32>
    %24 = vector.shape_cast %22 : vector<1x640xf32> to vector<1x1x640xf32>
    %25 = vector.broadcast %24 : vector<1x1x640xf32> to vector<4x8x640xf32>
    %26 = vector.broadcast %23 : vector<4x8x1xf32> to vector<4x8x640xf32>
    %27 = arith.mulf %25, %26 : vector<4x8x640xf32>
    %28 = arith.addf %21, %27 : vector<4x8x640xf32>
    %c0_15 = arith.constant 0 : index
    %c17 = arith.constant 17 : index
    %29 = vector.load %arg0[%c0_15, %c17] : memref<4x658xf32, #tpu.memory_space<vmem>>, vector<1x640xf32>
    %c0_16 = arith.constant 0 : index
    %c0_17 = arith.constant 0 : index
    %c4 = arith.constant 4 : index
    %30 = vector.load %arg1[%c0_16, %c0_17, %c4] : memref<4x8x16xf32, #tpu.memory_space<vmem>>, vector<4x8x1xf32>
    %31 = vector.shape_cast %29 : vector<1x640xf32> to vector<1x1x640xf32>
    %32 = vector.broadcast %31 : vector<1x1x640xf32> to vector<4x8x640xf32>
    %33 = vector.broadcast %30 : vector<4x8x1xf32> to vector<4x8x640xf32>
    %34 = arith.mulf %32, %33 : vector<4x8x640xf32>
    %35 = arith.addf %28, %34 : vector<4x8x640xf32>
    %c1_18 = arith.constant 1 : index
    %c17_19 = arith.constant 17 : index
    %36 = vector.load %arg0[%c1_18, %c17_19] : memref<4x658xf32, #tpu.memory_space<vmem>>, vector<1x640xf32>
    %c0_20 = arith.constant 0 : index
    %c0_21 = arith.constant 0 : index
    %c5 = arith.constant 5 : index
    %37 = vector.load %arg1[%c0_20, %c0_21, %c5] : memref<4x8x16xf32, #tpu.memory_space<vmem>>, vector<4x8x1xf32>
    %38 = vector.shape_cast %36 : vector<1x640xf32> to vector<1x1x640xf32>
    %39 = vector.broadcast %38 : vector<1x1x640xf32> to vector<4x8x640xf32>
    %40 = vector.broadcast %37 : vector<4x8x1xf32> to vector<4x8x640xf32>
    %41 = arith.mulf %39, %40 : vector<4x8x640xf32>
    %42 = arith.addf %35, %41 : vector<4x8x640xf32>
    %c2_22 = arith.constant 2 : index
    %c17_23 = arith.constant 17 : index
    %43 = vector.load %arg0[%c2_22, %c17_23] : memref<4x658xf32, #tpu.memory_space<vmem>>, vector<1x640xf32>
    %c0_24 = arith.constant 0 : index
    %c0_25 = arith.constant 0 : index
    %c6 = arith.constant 6 : index
    %44 = vector.load %arg1[%c0_24, %c0_25, %c6] : memref<4x8x16xf32, #tpu.memory_space<vmem>>, vector<4x8x1xf32>
    %45 = vector.shape_cast %43 : vector<1x640xf32> to vector<1x1x640xf32>
    %46 = vector.broadcast %45 : vector<1x1x640xf32> to vector<4x8x640xf32>
    %47 = vector.broadcast %44 : vector<4x8x1xf32> to vector<4x8x640xf32>
    %48 = arith.mulf %46, %47 : vector<4x8x640xf32>
    %49 = arith.addf %42, %48 : vector<4x8x640xf32>
    %c3_26 = arith.constant 3 : index
    %c17_27 = arith.constant 17 : index
    %50 = vector.load %arg0[%c3_26, %c17_27] : memref<4x658xf32, #tpu.memory_space<vmem>>, vector<1x640xf32>
    %c0_28 = arith.constant 0 : index
    %c0_29 = arith.constant 0 : index
    %c7 = arith.constant 7 : index
    %51 = vector.load %arg1[%c0_28, %c0_29, %c7] : memref<4x8x16xf32, #tpu.memory_space<vmem>>, vector<4x8x1xf32>
    %52 = vector.shape_cast %50 : vector<1x640xf32> to vector<1x1x640xf32>
    %53 = vector.broadcast %52 : vector<1x1x640xf32> to vector<4x8x640xf32>
    %54 = vector.broadcast %51 : vector<4x8x1xf32> to vector<4x8x640xf32>
    %55 = arith.mulf %53, %54 : vector<4x8x640xf32>
    %56 = arith.addf %49, %55 : vector<4x8x640xf32>
    %c0_30 = arith.constant 0 : index
    %c1_31 = arith.constant 1 : index
    %57 = vector.load %arg0[%c0_30, %c1_31] : memref<4x658xf32, #tpu.memory_space<vmem>>, vector<1x640xf32>
    %c0_32 = arith.constant 0 : index
    %c0_33 = arith.constant 0 : index
    %c8 = arith.constant 8 : index
    %58 = vector.load %arg1[%c0_32, %c0_33, %c8] : memref<4x8x16xf32, #tpu.memory_space<vmem>>, vector<4x8x1xf32>
    %59 = vector.shape_cast %57 : vector<1x640xf32> to vector<1x1x640xf32>
    %60 = vector.broadcast %59 : vector<1x1x640xf32> to vector<4x8x640xf32>
    %61 = vector.broadcast %58 : vector<4x8x1xf32> to vector<4x8x640xf32>
    %62 = arith.mulf %60, %61 : vector<4x8x640xf32>
    %63 = arith.addf %56, %62 : vector<4x8x640xf32>
    %c1_34 = arith.constant 1 : index
    %c1_35 = arith.constant 1 : index
    %64 = vector.load %arg0[%c1_34, %c1_35] : memref<4x658xf32, #tpu.memory_space<vmem>>, vector<1x640xf32>
    %c0_36 = arith.constant 0 : index
    %c0_37 = arith.constant 0 : index
    %c9 = arith.constant 9 : index
    %65 = vector.load %arg1[%c0_36, %c0_37, %c9] : memref<4x8x16xf32, #tpu.memory_space<vmem>>, vector<4x8x1xf32>
    %66 = vector.shape_cast %64 : vector<1x640xf32> to vector<1x1x640xf32>
    %67 = vector.broadcast %66 : vector<1x1x640xf32> to vector<4x8x640xf32>
    %68 = vector.broadcast %65 : vector<4x8x1xf32> to vector<4x8x640xf32>
    %69 = arith.mulf %67, %68 : vector<4x8x640xf32>
    %70 = arith.addf %63, %69 : vector<4x8x640xf32>
    %c2_38 = arith.constant 2 : index
    %c1_39 = arith.constant 1 : index
    %71 = vector.load %arg0[%c2_38, %c1_39] : memref<4x658xf32, #tpu.memory_space<vmem>>, vector<1x640xf32>
    %c0_40 = arith.constant 0 : index
    %c0_41 = arith.constant 0 : index
    %c10 = arith.constant 10 : index
    %72 = vector.load %arg1[%c0_40, %c0_41, %c10] : memref<4x8x16xf32, #tpu.memory_space<vmem>>, vector<4x8x1xf32>
    %73 = vector.shape_cast %71 : vector<1x640xf32> to vector<1x1x640xf32>
    %74 = vector.broadcast %73 : vector<1x1x640xf32> to vector<4x8x640xf32>
    %75 = vector.broadcast %72 : vector<4x8x1xf32> to vector<4x8x640xf32>
    %76 = arith.mulf %74, %75 : vector<4x8x640xf32>
    %77 = arith.addf %70, %76 : vector<4x8x640xf32>
    %c3_42 = arith.constant 3 : index
    %c1_43 = arith.constant 1 : index
    %78 = vector.load %arg0[%c3_42, %c1_43] : memref<4x658xf32, #tpu.memory_space<vmem>>, vector<1x640xf32>
    %c0_44 = arith.constant 0 : index
    %c0_45 = arith.constant 0 : index
    %c11 = arith.constant 11 : index
    %79 = vector.load %arg1[%c0_44, %c0_45, %c11] : memref<4x8x16xf32, #tpu.memory_space<vmem>>, vector<4x8x1xf32>
    %80 = vector.shape_cast %78 : vector<1x640xf32> to vector<1x1x640xf32>
    %81 = vector.broadcast %80 : vector<1x1x640xf32> to vector<4x8x640xf32>
    %82 = vector.broadcast %79 : vector<4x8x1xf32> to vector<4x8x640xf32>
    %83 = arith.mulf %81, %82 : vector<4x8x640xf32>
    %84 = arith.addf %77, %83 : vector<4x8x640xf32>
    %c0_46 = arith.constant 0 : index
    %c0_47 = arith.constant 0 : index
    %85 = vector.load %arg0[%c0_46, %c0_47] : memref<4x658xf32, #tpu.memory_space<vmem>>, vector<1x640xf32>
    %c0_48 = arith.constant 0 : index
    %c0_49 = arith.constant 0 : index
    %c12 = arith.constant 12 : index
    %86 = vector.load %arg1[%c0_48, %c0_49, %c12] : memref<4x8x16xf32, #tpu.memory_space<vmem>>, vector<4x8x1xf32>
    %87 = vector.shape_cast %85 : vector<1x640xf32> to vector<1x1x640xf32>
    %88 = vector.broadcast %87 : vector<1x1x640xf32> to vector<4x8x640xf32>
    %89 = vector.broadcast %86 : vector<4x8x1xf32> to vector<4x8x640xf32>
    %90 = arith.mulf %88, %89 : vector<4x8x640xf32>
    %91 = arith.addf %84, %90 : vector<4x8x640xf32>
    %c1_50 = arith.constant 1 : index
    %c0_51 = arith.constant 0 : index
    %92 = vector.load %arg0[%c1_50, %c0_51] : memref<4x658xf32, #tpu.memory_space<vmem>>, vector<1x640xf32>
    %c0_52 = arith.constant 0 : index
    %c0_53 = arith.constant 0 : index
    %c13 = arith.constant 13 : index
    %93 = vector.load %arg1[%c0_52, %c0_53, %c13] : memref<4x8x16xf32, #tpu.memory_space<vmem>>, vector<4x8x1xf32>
    %94 = vector.shape_cast %92 : vector<1x640xf32> to vector<1x1x640xf32>
    %95 = vector.broadcast %94 : vector<1x1x640xf32> to vector<4x8x640xf32>
    %96 = vector.broadcast %93 : vector<4x8x1xf32> to vector<4x8x640xf32>
    %97 = arith.mulf %95, %96 : vector<4x8x640xf32>
    %98 = arith.addf %91, %97 : vector<4x8x640xf32>
    %c2_54 = arith.constant 2 : index
    %c0_55 = arith.constant 0 : index
    %99 = vector.load %arg0[%c2_54, %c0_55] : memref<4x658xf32, #tpu.memory_space<vmem>>, vector<1x640xf32>
    %c0_56 = arith.constant 0 : index
    %c0_57 = arith.constant 0 : index
    %c14 = arith.constant 14 : index
    %100 = vector.load %arg1[%c0_56, %c0_57, %c14] : memref<4x8x16xf32, #tpu.memory_space<vmem>>, vector<4x8x1xf32>
    %101 = vector.shape_cast %99 : vector<1x640xf32> to vector<1x1x640xf32>
    %102 = vector.broadcast %101 : vector<1x1x640xf32> to vector<4x8x640xf32>
    %103 = vector.broadcast %100 : vector<4x8x1xf32> to vector<4x8x640xf32>
    %104 = arith.mulf %102, %103 : vector<4x8x640xf32>
    %105 = arith.addf %98, %104 : vector<4x8x640xf32>
    %c3_58 = arith.constant 3 : index
    %c0_59 = arith.constant 0 : index
    %106 = vector.load %arg0[%c3_58, %c0_59] : memref<4x658xf32, #tpu.memory_space<vmem>>, vector<1x640xf32>
    %c0_60 = arith.constant 0 : index
    %c0_61 = arith.constant 0 : index
    %c15 = arith.constant 15 : index
    %107 = vector.load %arg1[%c0_60, %c0_61, %c15] : memref<4x8x16xf32, #tpu.memory_space<vmem>>, vector<4x8x1xf32>
    %108 = vector.shape_cast %106 : vector<1x640xf32> to vector<1x1x640xf32>
    %109 = vector.broadcast %108 : vector<1x1x640xf32> to vector<4x8x640xf32>
    %110 = vector.broadcast %107 : vector<4x8x1xf32> to vector<4x8x640xf32>
    %111 = arith.mulf %109, %110 : vector<4x8x640xf32>
    %112 = arith.addf %105, %111 : vector<4x8x640xf32>
    %c0_62 = arith.constant 0 : index
    %c0_63 = arith.constant 0 : index
    %c0_64 = arith.constant 0 : index
    %113 = vector.load %arg2[%c0_62, %c0_63, %c0_64] : memref<1x8x1xf32, #tpu.memory_space<vmem>>, vector<1x8x1xf32>
    %114 = vector.broadcast %113 : vector<1x8x1xf32> to vector<4x8x640xf32>
    %115 = arith.addf %112, %114 : vector<4x8x640xf32>
    %c0_65 = arith.constant 0 : index
    %c0_66 = arith.constant 0 : index
    %c0_67 = arith.constant 0 : index
    %116 = vector.load %arg5[%c0_65, %c0_66, %c0_67] : memref<4x1x640xf32, #tpu.memory_space<vmem>>, vector<4x1x640xf32>
    %117 = vector.broadcast %116 : vector<4x1x640xf32> to vector<4x8x640xf32>
    %118 = arith.mulf %115, %117 : vector<4x8x640xf32>
    %cst_68 = arith.constant dense<0.000000e+00> : vector<4x8xf32>
    %119 = vector.multi_reduction <add>, %118, %cst_68 [2] : vector<4x8x640xf32> to vector<4x8xf32>
    %120 = vector.shape_cast %119 : vector<4x8xf32> to vector<4x8x1xf32>
    %cst_69 = arith.constant dense<0.000000e+00> : vector<8x1xf32>
    %121 = vector.multi_reduction <add>, %120, %cst_69 [0] : vector<4x8x1xf32> to vector<8x1xf32>
    %122 = vector.shape_cast %121 : vector<8x1xf32> to vector<1x8x1xf32>
    %cst_70 = arith.constant 5.20291389E-4 : f32
    %123 = vector.broadcast %cst_70 : f32 to vector<1x8x1xf32>
    %124 = arith.mulf %122, %123 : vector<1x8x1xf32>
    %125 = arith.mulf %118, %115 : vector<4x8x640xf32>
    %cst_71 = arith.constant dense<0.000000e+00> : vector<4x8xf32>
    %126 = vector.multi_reduction <add>, %125, %cst_71 [2] : vector<4x8x640xf32> to vector<4x8xf32>
    %127 = vector.shape_cast %126 : vector<4x8xf32> to vector<4x8x1xf32>
    %cst_72 = arith.constant dense<0.000000e+00> : vector<8x1xf32>
    %128 = vector.multi_reduction <add>, %127, %cst_72 [0] : vector<4x8x1xf32> to vector<8x1xf32>
    %129 = vector.shape_cast %128 : vector<8x1xf32> to vector<1x8x1xf32>
    %cst_73 = arith.constant 5.20291389E-4 : f32
    %130 = vector.broadcast %cst_73 : f32 to vector<1x8x1xf32>
    %131 = arith.mulf %129, %130 : vector<1x8x1xf32>
    %132 = arith.mulf %124, %124 : vector<1x8x1xf32>
    %133 = arith.subf %131, %132 : vector<1x8x1xf32>
    %cst_74 = arith.constant 9.99999974E-6 : f32
    %134 = vector.broadcast %cst_74 : f32 to vector<1x8x1xf32>
    %135 = arith.addf %133, %134 : vector<1x8x1xf32>
    %136 = math.rsqrt %135 : vector<1x8x1xf32>
    %c0_75 = arith.constant 0 : index
    %c0_76 = arith.constant 0 : index
    %c0_77 = arith.constant 0 : index
    %137 = vector.load %arg3[%c0_75, %c0_76, %c0_77] : memref<1x8x1xf32, #tpu.memory_space<vmem>>, vector<1x8x1xf32>
    %138 = arith.mulf %136, %137 : vector<1x8x1xf32>
    %c0_78 = arith.constant 0 : index
    %c0_79 = arith.constant 0 : index
    %c0_80 = arith.constant 0 : index
    %139 = vector.load %arg4[%c0_78, %c0_79, %c0_80] : memref<1x8x1xf32, #tpu.memory_space<vmem>>, vector<1x8x1xf32>
    %140 = arith.mulf %124, %138 : vector<1x8x1xf32>
    %141 = arith.subf %139, %140 : vector<1x8x1xf32>
    %142 = vector.broadcast %138 : vector<1x8x1xf32> to vector<4x8x640xf32>
    %143 = arith.mulf %115, %142 : vector<4x8x640xf32>
    %144 = vector.broadcast %141 : vector<1x8x1xf32> to vector<4x8x640xf32>
    %145 = arith.addf %143, %144 : vector<4x8x640xf32>
    %cst_81 = arith.constant 0.000000e+00 : f32
    %146 = vector.broadcast %cst_81 : f32 to vector<4x8x640xf32>
    %147 = arith.cmpf oge, %145, %146 : vector<4x8x640xf32>
    %cst_82 = arith.constant 0.00999999977 : f32
    %148 = vector.broadcast %cst_82 : f32 to vector<4x8x640xf32>
    %149 = arith.mulf %148, %145 : vector<4x8x640xf32>
    %150 = arith.select %147, %145, %149 : vector<4x8x640xi1>, vector<4x8x640xf32>
    %c0_83 = arith.constant 0 : index
    %c0_84 = arith.constant 0 : index
    %c0_85 = arith.constant 0 : index
    %151 = vector.load %arg6[%c0_83, %c0_84, %c0_85] : memref<4x8x640xf32, #tpu.memory_space<vmem>>, vector<4x8x640xf32>
    tpu.vector_store %arg6[%c0_83, %c0_84, %c0_85], %150 {strides = array<i32>} : memref<4x8x640xf32, #tpu.memory_space<vmem>>, vector<4x8x640xf32>,
    return
  }
}

</mosaic_0001>

<llo_original>
// kernel: tpu_custom_call.1
$region0: #{tpu_custom_call.1}
  #allocation0 [shape = 'u32[]', space=smem, size = 0x4, offset = 0x4, fixed_abs, tag = 'smem constant byte address 0x4 - core index']
  #allocation1 [shape = 'u32[144,128]{1,0:T(1,128)}', space=vmem, size = 0x12000, scoped, tag = 'internal scratch']
  %s0 = inlined_call_operand.vmem [shape: f32[4,658], index: 0, kind: input, shape index: {}]
  %s1 = inlined_call_operand.hbm [shape: f32[4,8,16], index: 1, kind: input, shape index: {}]
  %s2 = inlined_call_operand.vmem [shape: f32[1,8,1], index: 2, kind: input, shape index: {}]
  %s3 = inlined_call_operand.vmem [shape: f32[1,8,1], index: 3, kind: input, shape index: {}]
  %s4 = inlined_call_operand.vmem [shape: f32[1,8,1], index: 4, kind: input, shape index: {}]
  %s5 = inlined_call_operand.vmem [shape: f32[4,1,640], index: 5, kind: input, shape index: {}]
  %s6 = inlined_call_operand.hbm [shape: f32[4,8,640], index: 6, kind: output, shape index: {}]
  %s7 = sld [smem:[#allocation0]]
  $region38: #{tpu_custom_call.1} parent=0
    _
  %s9 = ssub.s32 1, %s7
  %s10 = scalar_select 0, %s9, %s7
  $region1: #{tpu_custom_call.1} parent=0
    #allocation2 [shape = 'u8[16384]{0}', space=vmem, size = 0x4000, scoped, tag = 'input window, operand 1, single buffered']
    #allocation3 [shape = 's32[1]{0}', space=sflag, size = 0x4, scoped, tag = 'scoped memory for tpu_custom_call.1']
    #allocation4 [shape = 's32[1]{0}', space=sflag, size = 0x4, scoped, tag = 'scoped memory for tpu_custom_call.1']
    #allocation5 [shape = 'u8[81920]{0}', space=vmem, size = 0x14000, scoped, tag = 'output window, operand 0, single buffered']
    %11 = vsyncpa [#allocation3], 0
    %12 = vsyncpa [#allocation4], 0
    // Predicated region
    $region2: #{tpu_custom_call.1} parent=1 // pred_check
      _
    $region3: #{tpu_custom_call.1} parent=1 // pred_check_branch
      %14 = sbr.rel (0) target = $region5
    $region4: #{tpu_custom_call.1} parent=1 // pred_region
      _
    $region5: #{tpu_custom_call.1} parent=1 // pred_fallthru
      _
    // Predicated region
    $region6: #{tpu_custom_call.1} parent=1 // pred_check
      _
    $region7: #{tpu_custom_call.1} parent=1 // pred_check_branch
      %16 = sbr.rel (0) target = $region9
    $region8: #{tpu_custom_call.1} parent=1 // pred_region
      %s18 = ssub.s32 512, 512
      %19 = vsyncadd [#allocation3], %s18
      %s20 = sshll.u32 [#allocation2], 4
      %s21 = int_to_ptr.vmem [resolvable:$true] %s20
      %26 = dma.hbm_to_vmem [thread:$0]  %s1, 512, %s21, [#allocation3], 128, 128, 8
    $region9: #{tpu_custom_call.1} parent=1 // pred_fallthru
      _
    // Predicated region
    $region10: #{tpu_custom_call.1} parent=1 // pred_check
      _
    $region11: #{tpu_custom_call.1} parent=1 // pred_check_branch
      %28 = sbr.rel (0) target = $region13
    $region12: #{tpu_custom_call.1} parent=1 // pred_region
      _
    $region13: #{tpu_custom_call.1} parent=1 // pred_fallthru
      _
    // Predicated region
    $region14: #{tpu_custom_call.1} parent=1 // pred_check
      _
    $region15: #{tpu_custom_call.1} parent=1 // pred_check_branch
      %30 = sbr.rel (0) target = $region17
    $region16: #{tpu_custom_call.1} parent=1 // pred_region
      _
    $region17: #{tpu_custom_call.1} parent=1 // pred_fallthru
      _
    // Predicated region
    $region18: #{tpu_custom_call.1} parent=1 // pred_check
      _
    $region19: #{tpu_custom_call.1} parent=1 // pred_check_branch
      %32 = sbr.rel (0) target = $region21
    $region20: #{tpu_custom_call.1} parent=1 // pred_region
      _
    $region21: #{tpu_custom_call.1} parent=1 // pred_fallthru
      _
    // Predicated region
    $region22: #{tpu_custom_call.1} parent=1 // pred_check
      _
    $region23: #{tpu_custom_call.1} parent=1 // pred_check_branch
      %34 = sbr.rel (0) target = $region25
    $region24: #{tpu_custom_call.1} parent=1 // pred_region
      _
    $region25: #{tpu_custom_call.1} parent=1 // pred_fallthru
      _
    // Predicated region
    $region26: #{tpu_custom_call.1} parent=1 // pred_check
      _
    $region27: #{tpu_custom_call.1} parent=1 // pred_check_branch
      %36 = sbr.rel (0) target = $region29
    $region28: #{tpu_custom_call.1} parent=1 // pred_region
      %37 = dma.done [#allocation3], 512
    $region29: #{tpu_custom_call.1} parent=1 // pred_fallthru
      _
    %v38 = vld [vmem:[%s0] ss:$4 sm:$0x3f]
    %v39 = vld [vmem:[#allocation2] sm:$0xff]
    %v40 = vld [vmem:[#allocation2 + $0x8] sm:$0xff]
    %v41 = vld [vmem:[#allocation2 + $0x10] sm:$0xff]
    %v42 = vld [vmem:[#allocation2 + $0x18] sm:$0xff]
    %v44 = vlaneseq
    %v45 = vshrl.u32 %v44, 7
    %v46 = vsub.s32 0, %v45
    %v47 = vrot.slane %v38, %v46
    %v48 = vlaneseq
    %v49 = vshrl.u32 %v48, 7
    %v50 = vsub.s32 1, %v49
    %v51 = vrot.slane %v38, %v50
    %v52 = vlaneseq
    %v53 = vshrl.u32 %v52, 7
    %v54 = vsub.s32 2, %v53
    %v55 = vrot.slane %v38, %v54
    %v56 = vlaneseq
    %v57 = vshrl.u32 %v56, 7
    %v58 = vsub.s32 3, %v57
    %v59 = vrot.slane %v38, %v58
    %v60 = vlaneseq
    %v61 = vshrl.u32 %v60, 7
    %v62 = vsub.s32 4, %v61
    %v63 = vrot.slane %v38, %v62
    %v64 = vlaneseq
    %v65 = vshrl.u32 %v64, 7
    %v66 = vsub.s32 5, %v65
    %v67 = vrot.slane %v38, %v66
    %75 = vset.pattern.permute.xlu0 0
    %76 = vperm.xlu0 %75, %v39
    %v77 = vpop.permute.xlu0 %76
    %80 = vset.pattern.permute.xlu0 0
    %81 = vperm.xlu0 %80, %v40
    %v82 = vpop.permute.xlu0 %81
    %85 = vset.pattern.permute.xlu0 0
    %86 = vperm.xlu0 %85, %v41
    %v87 = vpop.permute.xlu0 %86
    %90 = vset.pattern.permute.xlu0 0
    %91 = vperm.xlu0 %90, %v42
    %v92 = vpop.permute.xlu0 %91
    %v94 = vmul.f32 %v47, %v77
    %v95 = vmul.f32 %v51, %v77
    %v96 = vmul.f32 %v55, %v77
    %v97 = vmul.f32 %v59, %v77
    %v98 = vmul.f32 %v63, %v77
    %v99 = vmul.f32 %v67, %v77
    %v100 = vmul.f32 %v47, %v82
    %v101 = vmul.f32 %v51, %v82
    %v102 = vmul.f32 %v55, %v82
    %v103 = vmul.f32 %v59, %v82
    %v104 = vmul.f32 %v63, %v82
    %v105 = vmul.f32 %v67, %v82
    %v106 = vmul.f32 %v47, %v87
    %v107 = vmul.f32 %v51, %v87
    %v108 = vmul.f32 %v55, %v87
    %v109 = vmul.f32 %v59, %v87
    %v110 = vmul.f32 %v63, %v87
    %v111 = vmul.f32 %v67, %v87
    %v112 = vmul.f32 %v47, %v92
    %v113 = vmul.f32 %v51, %v92
    %v114 = vmul.f32 %v55, %v92
    %v115 = vmul.f32 %v59, %v92
    %v116 = vmul.f32 %v63, %v92
    %v117 = vmul.f32 %v67, %v92
    %v118 = vadd.f32 %v94, 0.0
    %v119 = vadd.f32 %v95, 0.0
    %v120 = vadd.f32 %v96, 0.0
    %v121 = vadd.f32 %v97, 0.0
    %v122 = vadd.f32 %v98, 0.0
    %v123 = vadd.f32 %v99, 0.0
    %v124 = vadd.f32 %v100, 0.0
    %v125 = vadd.f32 %v101, 0.0
    %v126 = vadd.f32 %v102, 0.0
    %v127 = vadd.f32 %v103, 0.0
    %v128 = vadd.f32 %v104, 0.0
    %v129 = vadd.f32 %v105, 0.0
    %v130 = vadd.f32 %v106, 0.0
    %v131 = vadd.f32 %v107, 0.0
    %v132 = vadd.f32 %v108, 0.0
    %v133 = vadd.f32 %v109, 0.0
    %v134 = vadd.f32 %v110, 0.0
    %v135 = vadd.f32 %v111, 0.0
    %v136 = vadd.f32 %v112, 0.0
    %v137 = vadd.f32 %v113, 0.0
    %v138 = vadd.f32 %v114, 0.0
    %v139 = vadd.f32 %v115, 0.0
    %v140 = vadd.f32 %v116, 0.0
    %v141 = vadd.f32 %v117, 0.0
    %s142 = scalar_lea.vmem %s0, 1
    %v143 = vld [vmem:[%s142] ss:$4 sm:$0x3f]
    %v145 = vlaneseq
    %v146 = vshrl.u32 %v145, 7
    %v147 = vsub.s32 0, %v146
    %v148 = vrot.slane %v143, %v147
    %v149 = vlaneseq
    %v150 = vshrl.u32 %v149, 7
    %v151 = vsub.s32 1, %v150
    %v152 = vrot.slane %v143, %v151
    %v153 = vlaneseq
    %v154 = vshrl.u32 %v153, 7
    %v155 = vsub.s32 2, %v154
    %v156 = vrot.slane %v143, %v155
    %v157 = vlaneseq
    %v158 = vshrl.u32 %v157, 7
    %v159 = vsub.s32 3, %v158
    %v160 = vrot.slane %v143, %v159
    %v161 = vlaneseq
    %v162 = vshrl.u32 %v161, 7
    %v163 = vsub.s32 4, %v162
    %v164 = vrot.slane %v143, %v163
    %v165 = vlaneseq
    %v166 = vshrl.u32 %v165, 7
    %v167 = vsub.s32 5, %v166
    %v168 = vrot.slane %v143, %v167
    %175 = vset.pattern.permute.xlu0 1
    %176 = vperm.xlu0 %175, %v39
    %v177 = vpop.permute.xlu0 %176
    %179 = vset.pattern.permute.xlu0 1
    %180 = vperm.xlu0 %179, %v40
    %v181 = vpop.permute.xlu0 %180
    %183 = vset.pattern.permute.xlu0 1
    %184 = vperm.xlu0 %183, %v41
    %v185 = vpop.permute.xlu0 %184
    %187 = vset.pattern.permute.xlu0 1
    %188 = vperm.xlu0 %187, %v42
    %v189 = vpop.permute.xlu0 %188
    %v191 = vmul.f32 %v148, %v177
    %v192 = vmul.f32 %v152, %v177
    %v193 = vmul.f32 %v156, %v177
    %v194 = vmul.f32 %v160, %v177
    %v195 = vmul.f32 %v164, %v177
    %v196 = vmul.f32 %v168, %v177
    %v197 = vmul.f32 %v148, %v181
    %v198 = vmul.f32 %v152, %v181
    %v199 = vmul.f32 %v156, %v181
    %v200 = vmul.f32 %v160, %v181
    %v201 = vmul.f32 %v164, %v181
    %v202 = vmul.f32 %v168, %v181
    %v203 = vmul.f32 %v148, %v185
    %v204 = vmul.f32 %v152, %v185
    %v205 = vmul.f32 %v156, %v185
    %v206 = vmul.f32 %v160, %v185
    %v207 = vmul.f32 %v164, %v185
    %v208 = vmul.f32 %v168, %v185
    %v209 = vmul.f32 %v148, %v189
    %v210 = vmul.f32 %v152, %v189
    %v211 = vmul.f32 %v156, %v189
    %v212 = vmul.f32 %v160, %v189
    %v213 = vmul.f32 %v164, %v189
    %v214 = vmul.f32 %v168, %v189
    %v215 = vadd.f32 %v118, %v191
    %v216 = vadd.f32 %v119, %v192
    %v217 = vadd.f32 %v120, %v193
    %v218 = vadd.f32 %v121, %v194
    %v219 = vadd.f32 %v122, %v195
    %v220 = vadd.f32 %v123, %v196
    %v221 = vadd.f32 %v124, %v197
    %v222 = vadd.f32 %v125, %v198
    %v223 = vadd.f32 %v126, %v199
    %v224 = vadd.f32 %v127, %v200
    %v225 = vadd.f32 %v128, %v201
    %v226 = vadd.f32 %v129, %v202
    %v227 = vadd.f32 %v130, %v203
    %v228 = vadd.f32 %v131, %v204
    %v229 = vadd.f32 %v132, %v205
    %v230 = vadd.f32 %v133, %v206
    %v231 = vadd.f32 %v134, %v207
    %v232 = vadd.f32 %v135, %v208
    %v233 = vadd.f32 %v136, %v209
    %v234 = vadd.f32 %v137, %v210
    %v235 = vadd.f32 %v138, %v211
    %v236 = vadd.f32 %v139, %v212
    %v237 = vadd.f32 %v140, %v213
    %v238 = vadd.f32 %v141, %v214
    %s239 = scalar_lea.vmem %s0, 2
    %v240 = vld [vmem:[%s239] ss:$4 sm:$0x3f]
    %v242 = vlaneseq
    %v243 = vshrl.u32 %v242, 7
    %v244 = vsub.s32 0, %v243
    %v245 = vrot.slane %v240, %v244
    %v246 = vlaneseq
    %v247 = vshrl.u32 %v246, 7
    %v248 = vsub.s32 1, %v247
    %v249 = vrot.slane %v240, %v248
    %v250 = vlaneseq
    %v251 = vshrl.u32 %v250, 7
    %v252 = vsub.s32 2, %v251
    %v253 = vrot.slane %v240, %v252
    %v254 = vlaneseq
    %v255 = vshrl.u32 %v254, 7
    %v256 = vsub.s32 3, %v255
    %v257 = vrot.slane %v240, %v256
    %v258 = vlaneseq
    %v259 = vshrl.u32 %v258, 7
    %v260 = vsub.s32 4, %v259
    %v261 = vrot.slane %v240, %v260
    %v262 = vlaneseq
    %v263 = vshrl.u32 %v262, 7
    %v264 = vsub.s32 5, %v263
    %v265 = vrot.slane %v240, %v264
    %272 = vset.pattern.permute.xlu0 2
    %273 = vperm.xlu0 %272, %v39
    %v274 = vpop.permute.xlu0 %273
    %276 = vset.pattern.permute.xlu0 2
    %277 = vperm.xlu0 %276, %v40
    %v278 = vpop.permute.xlu0 %277
    %280 = vset.pattern.permute.xlu0 2
    %281 = vperm.xlu0 %280, %v41
    %v282 = vpop.permute.xlu0 %281
    %284 = vset.pattern.permute.xlu0 2
    %285 = vperm.xlu0 %284, %v42
    %v286 = vpop.permute.xlu0 %285
    %v288 = vmul.f32 %v245, %v274
    %v289 = vmul.f32 %v249, %v274
    %v290 = vmul.f32 %v253, %v274
    %v291 = vmul.f32 %v257, %v274
    %v292 = vmul.f32 %v261, %v274
    %v293 = vmul.f32 %v265, %v274
    %v294 = vmul.f32 %v245, %v278
    %v295 = vmul.f32 %v249, %v278
    %v296 = vmul.f32 %v253, %v278
    %v297 = vmul.f32 %v257, %v278
    %v298 = vmul.f32 %v261, %v278
    %v299 = vmul.f32 %v265, %v278
    %v300 = vmul.f32 %v245, %v282
    %v301 = vmul.f32 %v249, %v282
    %v302 = vmul.f32 %v253, %v282
    %v303 = vmul.f32 %v257, %v282
    %v304 = vmul.f32 %v261, %v282
    %v305 = vmul.f32 %v265, %v282
    %v306 = vmul.f32 %v245, %v286
    %v307 = vmul.f32 %v249, %v286
    %v308 = vmul.f32 %v253, %v286
    %v309 = vmul.f32 %v257, %v286
    %v310 = vmul.f32 %v261, %v286
    %v311 = vmul.f32 %v265, %v286
    %v312 = vadd.f32 %v215, %v288
    %v313 = vadd.f32 %v216, %v289
    %v314 = vadd.f32 %v217, %v290
    %v315 = vadd.f32 %v218, %v291
    %v316 = vadd.f32 %v219, %v292
    %v317 = vadd.f32 %v220, %v293
    %v318 = vadd.f32 %v221, %v294
    %v319 = vadd.f32 %v222, %v295
    %v320 = vadd.f32 %v223, %v296
    %v321 = vadd.f32 %v224, %v297
    %v322 = vadd.f32 %v225, %v298
    %v323 = vadd.f32 %v226, %v299
    %v324 = vadd.f32 %v227, %v300
    %v325 = vadd.f32 %v228, %v301
    %v326 = vadd.f32 %v229, %v302
    %v327 = vadd.f32 %v230, %v303
    %v328 = vadd.f32 %v231, %v304
    %v329 = vadd.f32 %v232, %v305
    %v330 = vadd.f32 %v233, %v306
    %v331 = vadd.f32 %v234, %v307
    %v332 = vadd.f32 %v235, %v308
    %v333 = vadd.f32 %v236, %v309
    %v334 = vadd.f32 %v237, %v310
    %v335 = vadd.f32 %v238, %v311
    %s336 = scalar_lea.vmem %s0, 3
    %v337 = vld [vmem:[%s336] ss:$4 sm:$0x3f]
    %v339 = vlaneseq
    %v340 = vshrl.u32 %v339, 7
    %v341 = vsub.s32 0, %v340
    %v342 = vrot.slane %v337, %v341
    %v343 = vlaneseq
    %v344 = vshrl.u32 %v343, 7
    %v345 = vsub.s32 1, %v344
    %v346 = vrot.slane %v337, %v345
    %v347 = vlaneseq
    %v348 = vshrl.u32 %v347, 7
    %v349 = vsub.s32 2, %v348
    %v350 = vrot.slane %v337, %v349
    %v351 = vlaneseq
    %v352 = vshrl.u32 %v351, 7
    %v353 = vsub.s32 3, %v352
    %v354 = vrot.slane %v337, %v353
    %v355 = vlaneseq
    %v356 = vshrl.u32 %v355, 7
    %v357 = vsub.s32 4, %v356
    %v358 = vrot.slane %v337, %v357
    %v359 = vlaneseq
    %v360 = vshrl.u32 %v359, 7
    %v361 = vsub.s32 5, %v360
    %v362 = vrot.slane %v337, %v361
    %369 = vset.pattern.permute.xlu0 3
    %370 = vperm.xlu0 %369, %v39
    %v371 = vpop.permute.xlu0 %370
    %373 = vset.pattern.permute.xlu0 3
    %374 = vperm.xlu0 %373, %v40
    %v375 = vpop.permute.xlu0 %374
    %377 = vset.pattern.permute.xlu0 3
    %378 = vperm.xlu0 %377, %v41
    %v379 = vpop.permute.xlu0 %378
    %381 = vset.pattern.permute.xlu0 3
    %382 = vperm.xlu0 %381, %v42
    %v383 = vpop.permute.xlu0 %382
    %v385 = vmul.f32 %v342, %v371
    %v386 = vmul.f32 %v346, %v371
    %v387 = vmul.f32 %v350, %v371
    %v388 = vmul.f32 %v354, %v371
    %v389 = vmul.f32 %v358, %v371
    %v390 = vmul.f32 %v362, %v371
    %v391 = vmul.f32 %v342, %v375
    %v392 = vmul.f32 %v346, %v375
    %v393 = vmul.f32 %v350, %v375
    %v394 = vmul.f32 %v354, %v375
    %v395 = vmul.f32 %v358, %v375
    %v396 = vmul.f32 %v362, %v375
    %v397 = vmul.f32 %v342, %v379
    %v398 = vmul.f32 %v346, %v379
    %v399 = vmul.f32 %v350, %v379
    %v400 = vmul.f32 %v354, %v379
    %v401 = vmul.f32 %v358, %v379
    %v402 = vmul.f32 %v362, %v379
    %v403 = vmul.f32 %v342, %v383
    %v404 = vmul.f32 %v346, %v383
    %v405 = vmul.f32 %v350, %v383
    %v406 = vmul.f32 %v354, %v383
    %v407 = vmul.f32 %v358, %v383
    %v408 = vmul.f32 %v362, %v383
    %v409 = vadd.f32 %v312, %v385
    %v410 = vadd.f32 %v313, %v386
    %v411 = vadd.f32 %v314, %v387
    %v412 = vadd.f32 %v315, %v388
    %v413 = vadd.f32 %v316, %v389
    %v414 = vadd.f32 %v317, %v390
    %v415 = vadd.f32 %v318, %v391
    %v416 = vadd.f32 %v319, %v392
    %v417 = vadd.f32 %v320, %v393
    %v418 = vadd.f32 %v321, %v394
    %v419 = vadd.f32 %v322, %v395
    %v420 = vadd.f32 %v323, %v396
    %v421 = vadd.f32 %v324, %v397
    %v422 = vadd.f32 %v325, %v398
    %v423 = vadd.f32 %v326, %v399
    %v424 = vadd.f32 %v327, %v400
    %v425 = vadd.f32 %v328, %v401
    %v426 = vadd.f32 %v329, %v402
    %v427 = vadd.f32 %v330, %v403
    %v428 = vadd.f32 %v331, %v404
    %v429 = vadd.f32 %v332, %v405
    %v430 = vadd.f32 %v333, %v406
    %v431 = vadd.f32 %v334, %v407
    %v432 = vadd.f32 %v335, %v408
    %433 = vset.pattern.permute.xlu0 4
    %434 = vperm.xlu0 %433, %v39
    %v435 = vpop.permute.xlu0 %434
    %437 = vset.pattern.permute.xlu0 4
    %438 = vperm.xlu0 %437, %v40
    %v439 = vpop.permute.xlu0 %438
    %441 = vset.pattern.permute.xlu0 4
    %442 = vperm.xlu0 %441, %v41
    %v443 = vpop.permute.xlu0 %442
    %445 = vset.pattern.permute.xlu0 4
    %446 = vperm.xlu0 %445, %v42
    %v447 = vpop.permute.xlu0 %446
    %v449 = vmul.f32 %v47, %v435
    %v450 = vmul.f32 %v51, %v435
    %v451 = vmul.f32 %v55, %v435
    %v452 = vmul.f32 %v59, %v435
    %v453 = vmul.f32 %v63, %v435
    %v454 = vmul.f32 %v67, %v435
    %v455 = vmul.f32 %v47, %v439
    %v456 = vmul.f32 %v51, %v439
    %v457 = vmul.f32 %v55, %v439
    %v458 = vmul.f32 %v59, %v439
    %v459 = vmul.f32 %v63, %v439
    %v460 = vmul.f32 %v67, %v439
    %v461 = vmul.f32 %v47, %v443
    %v462 = vmul.f32 %v51, %v443
    %v463 = vmul.f32 %v55, %v443
    %v464 = vmul.f32 %v59, %v443
    %v465 = vmul.f32 %v63, %v443
    %v466 = vmul.f32 %v67, %v443
    %v467 = vmul.f32 %v47, %v447
    %v468 = vmul.f32 %v51, %v447
    %v469 = vmul.f32 %v55, %v447
    %v470 = vmul.f32 %v59, %v447
    %v471 = vmul.f32 %v63, %v447
    %v472 = vmul.f32 %v67, %v447
    %497 = vrot.lane.b32.xlu0 %v449, 1
    %v498 = vpop.permute.xlu0 %497
    %499 = vrot.lane.b32.xlu0 %v450, 1
    %v500 = vpop.permute.xlu0 %499
    %501 = vrot.lane.b32.xlu0 %v451, 1
    %v502 = vpop.permute.xlu0 %501
    %503 = vrot.lane.b32.xlu0 %v452, 1
    %v504 = vpop.permute.xlu0 %503
    %505 = vrot.lane.b32.xlu0 %v453, 1
    %v506 = vpop.permute.xlu0 %505
    %507 = vrot.lane.b32.xlu0 %v454, 1
    %v508 = vpop.permute.xlu0 %507
    %509 = vrot.lane.b32.xlu0 %v455, 1
    %v510 = vpop.permute.xlu0 %509
    %511 = vrot.lane.b32.xlu0 %v456, 1
    %v512 = vpop.permute.xlu0 %511
    %513 = vrot.lane.b32.xlu0 %v457, 1
    %v514 = vpop.permute.xlu0 %513
    %515 = vrot.lane.b32.xlu0 %v458, 1
    %v516 = vpop.permute.xlu0 %515
    %517 = vrot.lane.b32.xlu0 %v459, 1
    %v518 = vpop.permute.xlu0 %517
    %519 = vrot.lane.b32.xlu0 %v460, 1
    %v520 = vpop.permute.xlu0 %519
    %521 = vrot.lane.b32.xlu0 %v461, 1
    %v522 = vpop.permute.xlu0 %521
    %523 = vrot.lane.b32.xlu0 %v462, 1
    %v524 = vpop.permute.xlu0 %523
    %525 = vrot.lane.b32.xlu0 %v463, 1
    %v526 = vpop.permute.xlu0 %525
    %527 = vrot.lane.b32.xlu0 %v464, 1
    %v528 = vpop.permute.xlu0 %527
    %529 = vrot.lane.b32.xlu0 %v465, 1
    %v530 = vpop.permute.xlu0 %529
    %531 = vrot.lane.b32.xlu0 %v466, 1
    %v532 = vpop.permute.xlu0 %531
    %533 = vrot.lane.b32.xlu0 %v467, 1
    %v534 = vpop.permute.xlu0 %533
    %535 = vrot.lane.b32.xlu0 %v468, 1
    %v536 = vpop.permute.xlu0 %535
    %537 = vrot.lane.b32.xlu0 %v469, 1
    %v538 = vpop.permute.xlu0 %537
    %539 = vrot.lane.b32.xlu0 %v470, 1
    %v540 = vpop.permute.xlu0 %539
    %541 = vrot.lane.b32.xlu0 %v471, 1
    %v542 = vpop.permute.xlu0 %541
    %543 = vrot.lane.b32.xlu0 %v472, 1
    %v544 = vpop.permute.xlu0 %543
    %vm545 = vcmask 7168
    %v546 = vsel %vm545, %v498, %v500
    %v547 = vsel %vm545, %v500, %v502
    %v548 = vsel %vm545, %v502, %v504
    %v549 = vsel %vm545, %v504, %v506
    %v550 = vsel %vm545, %v506, %v508
    %v551 = vsel %vm545, %v510, %v512
    %v552 = vsel %vm545, %v512, %v514
    %v553 = vsel %vm545, %v514, %v516
    %v554 = vsel %vm545, %v516, %v518
    %v555 = vsel %vm545, %v518, %v520
    %v556 = vsel %vm545, %v522, %v524
    %v557 = vsel %vm545, %v524, %v526
    %v558 = vsel %vm545, %v526, %v528
    %v559 = vsel %vm545, %v528, %v530
    %v560 = vsel %vm545, %v530, %v532
    %v561 = vsel %vm545, %v534, %v536
    %v562 = vsel %vm545, %v536, %v538
    %v563 = vsel %vm545, %v538, %v540
    %v564 = vsel %vm545, %v540, %v542
    %v565 = vsel %vm545, %v542, %v544
    %v590 = vadd.f32 %v409, %v498
    %v591 = vadd.f32 %v410, %v546
    %v592 = vadd.f32 %v411, %v547
    %v593 = vadd.f32 %v412, %v548
    %v594 = vadd.f32 %v413, %v549
    %v595 = vadd.f32 %v414, %v550
    %v596 = vadd.f32 %v415, %v510
    %v597 = vadd.f32 %v416, %v551
    %v598 = vadd.f32 %v417, %v552
    %v599 = vadd.f32 %v418, %v553
    %v600 = vadd.f32 %v419, %v554
    %v601 = vadd.f32 %v420, %v555
    %v602 = vadd.f32 %v421, %v522
    %v603 = vadd.f32 %v422, %v556
    %v604 = vadd.f32 %v423, %v557
    %v605 = vadd.f32 %v424, %v558
    %v606 = vadd.f32 %v425, %v559
    %v607 = vadd.f32 %v426, %v560
    %v608 = vadd.f32 %v427, %v534
    %v609 = vadd.f32 %v428, %v561
    %v610 = vadd.f32 %v429, %v562
    %v611 = vadd.f32 %v430, %v563
    %v612 = vadd.f32 %v431, %v564
    %v613 = vadd.f32 %v432, %v565
    %614 = vset.pattern.permute.xlu0 5
    %615 = vperm.xlu0 %614, %v39
    %v616 = vpop.permute.xlu0 %615
    %618 = vset.pattern.permute.xlu0 5
    %619 = vperm.xlu0 %618, %v40
    %v620 = vpop.permute.xlu0 %619
    %622 = vset.pattern.permute.xlu0 5
    %623 = vperm.xlu0 %622, %v41
    %v624 = vpop.permute.xlu0 %623
    %626 = vset.pattern.permute.xlu0 5
    %627 = vperm.xlu0 %626, %v42
    %v628 = vpop.permute.xlu0 %627
    %v630 = vmul.f32 %v148, %v616
    %v631 = vmul.f32 %v152, %v616
    %v632 = vmul.f32 %v156, %v616
    %v633 = vmul.f32 %v160, %v616
    %v634 = vmul.f32 %v164, %v616
    %v635 = vmul.f32 %v168, %v616
    %v636 = vmul.f32 %v148, %v620
    %v637 = vmul.f32 %v152, %v620
    %v638 = vmul.f32 %v156, %v620
    %v639 = vmul.f32 %v160, %v620
    %v640 = vmul.f32 %v164, %v620
    %v641 = vmul.f32 %v168, %v620
    %v642 = vmul.f32 %v148, %v624
    %v643 = vmul.f32 %v152, %v624
    %v644 = vmul.f32 %v156, %v624
    %v645 = vmul.f32 %v160, %v624
    %v646 = vmul.f32 %v164, %v624
    %v647 = vmul.f32 %v168, %v624
    %v648 = vmul.f32 %v148, %v628
    %v649 = vmul.f32 %v152, %v628
    %v650 = vmul.f32 %v156, %v628
    %v651 = vmul.f32 %v160, %v628
    %v652 = vmul.f32 %v164, %v628
    %v653 = vmul.f32 %v168, %v628
    %678 = vrot.lane.b32.xlu0 %v630, 1
    %v679 = vpop.permute.xlu0 %678
    %680 = vrot.lane.b32.xlu0 %v631, 1
    %v681 = vpop.permute.xlu0 %680
    %682 = vrot.lane.b32.xlu0 %v632, 1
    %v683 = vpop.permute.xlu0 %682
    %684 = vrot.lane.b32.xlu0 %v633, 1
    %v685 = vpop.permute.xlu0 %684
    %686 = vrot.lane.b32.xlu0 %v634, 1
    %v687 = vpop.permute.xlu0 %686
    %688 = vrot.lane.b32.xlu0 %v635, 1
    %v689 = vpop.permute.xlu0 %688
    %690 = vrot.lane.b32.xlu0 %v636, 1
    %v691 = vpop.permute.xlu0 %690
    %692 = vrot.lane.b32.xlu0 %v637, 1
    %v693 = vpop.permute.xlu0 %692
    %694 = vrot.lane.b32.xlu0 %v638, 1
    %v695 = vpop.permute.xlu0 %694
    %696 = vrot.lane.b32.xlu0 %v639, 1
    %v697 = vpop.permute.xlu0 %696
    %698 = vrot.lane.b32.xlu0 %v640, 1
    %v699 = vpop.permute.xlu0 %698
    %700 = vrot.lane.b32.xlu0 %v641, 1
    %v701 = vpop.permute.xlu0 %700
    %702 = vrot.lane.b32.xlu0 %v642, 1
    %v703 = vpop.permute.xlu0 %702
    %704 = vrot.lane.b32.xlu0 %v643, 1
    %v705 = vpop.permute.xlu0 %704
    %706 = vrot.lane.b32.xlu0 %v644, 1
    %v707 = vpop.permute.xlu0 %706
    %708 = vrot.lane.b32.xlu0 %v645, 1
    %v709 = vpop.permute.xlu0 %708
    %710 = vrot.lane.b32.xlu0 %v646, 1
    %v711 = vpop.permute.xlu0 %710
    %712 = vrot.lane.b32.xlu0 %v647, 1
    %v713 = vpop.permute.xlu0 %712
    %714 = vrot.lane.b32.xlu0 %v648, 1
    %v715 = vpop.permute.xlu0 %714
    %716 = vrot.lane.b32.xlu0 %v649, 1
    %v717 = vpop.permute.xlu0 %716
    %718 = vrot.lane.b32.xlu0 %v650, 1
    %v719 = vpop.permute.xlu0 %718
    %720 = vrot.lane.b32.xlu0 %v651, 1
    %v721 = vpop.permute.xlu0 %720
    %722 = vrot.lane.b32.xlu0 %v652, 1
    %v723 = vpop.permute.xlu0 %722
    %724 = vrot.lane.b32.xlu0 %v653, 1
    %v725 = vpop.permute.xlu0 %724
    %v726 = vsel %vm545, %v679, %v681
    %v727 = vsel %vm545, %v681, %v683
    %v728 = vsel %vm545, %v683, %v685
    %v729 = vsel %vm545, %v685, %v687
    %v730 = vsel %vm545, %v687, %v689
    %v731 = vsel %vm545, %v691, %v693
    %v732 = vsel %vm545, %v693, %v695
    %v733 = vsel %vm545, %v695, %v697
    %v734 = vsel %vm545, %v697, %v699
    %v735 = vsel %vm545, %v699, %v701
    %v736 = vsel %vm545, %v703, %v705
    %v737 = vsel %vm545, %v705, %v707
    %v738 = vsel %vm545, %v707, %v709
    %v739 = vsel %vm545, %v709, %v711
    %v740 = vsel %vm545, %v711, %v713
    %v741 = vsel %vm545, %v715, %v717
    %v742 = vsel %vm545, %v717, %v719
    %v743 = vsel %vm545, %v719, %v721
    %v744 = vsel %vm545, %v721, %v723
    %v745 = vsel %vm545, %v723, %v725
    %v770 = vadd.f32 %v590, %v679
    %v771 = vadd.f32 %v591, %v726
    %v772 = vadd.f32 %v592, %v727
    %v773 = vadd.f32 %v593, %v728
    %v774 = vadd.f32 %v594, %v729
    %v775 = vadd.f32 %v595, %v730
    %v776 = vadd.f32 %v596, %v691
    %v777 = vadd.f32 %v597, %v731
    %v778 = vadd.f32 %v598, %v732
    %v779 = vadd.f32 %v599, %v733
    %v780 = vadd.f32 %v600, %v734
    %v781 = vadd.f32 %v601, %v735
    %v782 = vadd.f32 %v602, %v703
    %v783 = vadd.f32 %v603, %v736
    %v784 = vadd.f32 %v604, %v737
    %v785 = vadd.f32 %v605, %v738
    %v786 = vadd.f32 %v606, %v739
    %v787 = vadd.f32 %v607, %v740
    %v788 = vadd.f32 %v608, %v715
    %v789 = vadd.f32 %v609, %v741
    %v790 = vadd.f32 %v610, %v742
    %v791 = vadd.f32 %v611, %v743
    %v792 = vadd.f32 %v612, %v744
    %v793 = vadd.f32 %v613, %v745
    %794 = vset.pattern.permute.xlu0 6
    %795 = vperm.xlu0 %794, %v39
    %v796 = vpop.permute.xlu0 %795
    %798 = vset.pattern.permute.xlu0 6
    %799 = vperm.xlu0 %798, %v40
    %v800 = vpop.permute.xlu0 %799
    %802 = vset.pattern.permute.xlu0 6
    %803 = vperm.xlu0 %802, %v41
    %v804 = vpop.permute.xlu0 %803
    %806 = vset.pattern.permute.xlu0 6
    %807 = vperm.xlu0 %806, %v42
    %v808 = vpop.permute.xlu0 %807
    %v810 = vmul.f32 %v245, %v796
    %v811 = vmul.f32 %v249, %v796
    %v812 = vmul.f32 %v253, %v796
    %v813 = vmul.f32 %v257, %v796
    %v814 = vmul.f32 %v261, %v796
    %v815 = vmul.f32 %v265, %v796
    %v816 = vmul.f32 %v245, %v800
    %v817 = vmul.f32 %v249, %v800
    %v818 = vmul.f32 %v253, %v800
    %v819 = vmul.f32 %v257, %v800
    %v820 = vmul.f32 %v261, %v800
    %v821 = vmul.f32 %v265, %v800
    %v822 = vmul.f32 %v245, %v804
    %v823 = vmul.f32 %v249, %v804
    %v824 = vmul.f32 %v253, %v804
    %v825 = vmul.f32 %v257, %v804
    %v826 = vmul.f32 %v261, %v804
    %v827 = vmul.f32 %v265, %v804
    %v828 = vmul.f32 %v245, %v808
    %v829 = vmul.f32 %v249, %v808
    %v830 = vmul.f32 %v253, %v808
    %v831 = vmul.f32 %v257, %v808
    %v832 = vmul.f32 %v261, %v808
    %v833 = vmul.f32 %v265, %v808
    %858 = vrot.lane.b32.xlu0 %v810, 1
    %v859 = vpop.permute.xlu0 %858
    %860 = vrot.lane.b32.xlu0 %v811, 1
    %v861 = vpop.permute.xlu0 %860
    %862 = vrot.lane.b32.xlu0 %v812, 1
    %v863 = vpop.permute.xlu0 %862
    %864 = vrot.lane.b32.xlu0 %v813, 1
    %v865 = vpop.permute.xlu0 %864
    %866 = vrot.lane.b32.xlu0 %v814, 1
    %v867 = vpop.permute.xlu0 %866
    %868 = vrot.lane.b32.xlu0 %v815, 1
    %v869 = vpop.permute.xlu0 %868
    %870 = vrot.lane.b32.xlu0 %v816, 1
    %v871 = vpop.permute.xlu0 %870
    %872 = vrot.lane.b32.xlu0 %v817, 1
    %v873 = vpop.permute.xlu0 %872
    %874 = vrot.lane.b32.xlu0 %v818, 1
    %v875 = vpop.permute.xlu0 %874
    %876 = vrot.lane.b32.xlu0 %v819, 1
    %v877 = vpop.permute.xlu0 %876
    %878 = vrot.lane.b32.xlu0 %v820, 1
    %v879 = vpop.permute.xlu0 %878
    %880 = vrot.lane.b32.xlu0 %v821, 1
    %v881 = vpop.permute.xlu0 %880
    %882 = vrot.lane.b32.xlu0 %v822, 1
    %v883 = vpop.permute.xlu0 %882
    %884 = vrot.lane.b32.xlu0 %v823, 1
    %v885 = vpop.permute.xlu0 %884
    %886 = vrot.lane.b32.xlu0 %v824, 1
    %v887 = vpop.permute.xlu0 %886
    %888 = vrot.lane.b32.xlu0 %v825, 1
    %v889 = vpop.permute.xlu0 %888
    %890 = vrot.lane.b32.xlu0 %v826, 1
    %v891 = vpop.permute.xlu0 %890
    %892 = vrot.lane.b32.xlu0 %v827, 1
    %v893 = vpop.permute.xlu0 %892
    %894 = vrot.lane.b32.xlu0 %v828, 1
    %v895 = vpop.permute.xlu0 %894
    %896 = vrot.lane.b32.xlu0 %v829, 1
    %v897 = vpop.permute.xlu0 %896
    %898 = vrot.lane.b32.xlu0 %v830, 1
    %v899 = vpop.permute.xlu0 %898
    %900 = vrot.lane.b32.xlu0 %v831, 1
    %v901 = vpop.permute.xlu0 %900
    %902 = vrot.lane.b32.xlu0 %v832, 1
    %v903 = vpop.permute.xlu0 %902
    %904 = vrot.lane.b32.xlu0 %v833, 1
    %v905 = vpop.permute.xlu0 %904
    %v906 = vsel %vm545, %v859, %v861
    %v907 = vsel %vm545, %v861, %v863
    %v908 = vsel %vm545, %v863, %v865
    %v909 = vsel %vm545, %v865, %v867
    %v910 = vsel %vm545, %v867, %v869
    %v911 = vsel %vm545, %v871, %v873
    %v912 = vsel %vm545, %v873, %v875
    %v913 = vsel %vm545, %v875, %v877
    %v914 = vsel %vm545, %v877, %v879
    %v915 = vsel %vm545, %v879, %v881
    %v916 = vsel %vm545, %v883, %v885
    %v917 = vsel %vm545, %v885, %v887
    %v918 = vsel %vm545, %v887, %v889
    %v919 = vsel %vm545, %v889, %v891
    %v920 = vsel %vm545, %v891, %v893
    %v921 = vsel %vm545, %v895, %v897
    %v922 = vsel %vm545, %v897, %v899
    %v923 = vsel %vm545, %v899, %v901
    %v924 = vsel %vm545, %v901, %v903
    %v925 = vsel %vm545, %v903, %v905
    %v950 = vadd.f32 %v770, %v859
    %v951 = vadd.f32 %v771, %v906
    %v952 = vadd.f32 %v772, %v907
    %v953 = vadd.f32 %v773, %v908
    %v954 = vadd.f32 %v774, %v909
    %v955 = vadd.f32 %v775, %v910
    %v956 = vadd.f32 %v776, %v871
    %v957 = vadd.f32 %v777, %v911
    %v958 = vadd.f32 %v778, %v912
    %v959 = vadd.f32 %v779, %v913
    %v960 = vadd.f32 %v780, %v914
    %v961 = vadd.f32 %v781, %v915
    %v962 = vadd.f32 %v782, %v883
    %v963 = vadd.f32 %v783, %v916
    %v964 = vadd.f32 %v784, %v917
    %v965 = vadd.f32 %v785, %v918
    %v966 = vadd.f32 %v786, %v919
    %v967 = vadd.f32 %v787, %v920
    %v968 = vadd.f32 %v788, %v895
    %v969 = vadd.f32 %v789, %v921
    %v970 = vadd.f32 %v790, %v922
    %v971 = vadd.f32 %v791, %v923
    %v972 = vadd.f32 %v792, %v924
    %v973 = vadd.f32 %v793, %v925
    %974 = vset.pattern.permute.xlu0 7
    %975 = vperm.xlu0 %974, %v39
    %v976 = vpop.permute.xlu0 %975
    %978 = vset.pattern.permute.xlu0 7
    %979 = vperm.xlu0 %978, %v40
    %v980 = vpop.permute.xlu0 %979
    %982 = vset.pattern.permute.xlu0 7
    %983 = vperm.xlu0 %982, %v41
    %v984 = vpop.permute.xlu0 %983
    %986 = vset.pattern.permute.xlu0 7
    %987 = vperm.xlu0 %986, %v42
    %v988 = vpop.permute.xlu0 %987
    %v990 = vmul.f32 %v342, %v976
    %v991 = vmul.f32 %v346, %v976
    %v992 = vmul.f32 %v350, %v976
    %v993 = vmul.f32 %v354, %v976
    %v994 = vmul.f32 %v358, %v976
    %v995 = vmul.f32 %v362, %v976
    %v996 = vmul.f32 %v342, %v980
    %v997 = vmul.f32 %v346, %v980
    %v998 = vmul.f32 %v350, %v980
    %v999 = vmul.f32 %v354, %v980
    %v1000 = vmul.f32 %v358, %v980
    %v1001 = vmul.f32 %v362, %v980
    %v1002 = vmul.f32 %v342, %v984
    %v1003 = vmul.f32 %v346, %v984
    %v1004 = vmul.f32 %v350, %v984
    %v1005 = vmul.f32 %v354, %v984
    %v1006 = vmul.f32 %v358, %v984
    %v1007 = vmul.f32 %v362, %v984
    %v1008 = vmul.f32 %v342, %v988
    %v1009 = vmul.f32 %v346, %v988
    %v1010 = vmul.f32 %v350, %v988
    %v1011 = vmul.f32 %v354, %v988
    %v1012 = vmul.f32 %v358, %v988
    %v1013 = vmul.f32 %v362, %v988
    %1038 = vrot.lane.b32.xlu0 %v990, 1
    %v1039 = vpop.permute.xlu0 %1038
    %1040 = vrot.lane.b32.xlu0 %v991, 1
    %v1041 = vpop.permute.xlu0 %1040
    %1042 = vrot.lane.b32.xlu0 %v992, 1
    %v1043 = vpop.permute.xlu0 %1042
    %1044 = vrot.lane.b32.xlu0 %v993, 1
    %v1045 = vpop.permute.xlu0 %1044
    %1046 = vrot.lane.b32.xlu0 %v994, 1
    %v1047 = vpop.permute.xlu0 %1046
    %1048 = vrot.lane.b32.xlu0 %v995, 1
    %v1049 = vpop.permute.xlu0 %1048
    %1050 = vrot.lane.b32.xlu0 %v996, 1
    %v1051 = vpop.permute.xlu0 %1050
    %1052 = vrot.lane.b32.xlu0 %v997, 1
    %v1053 = vpop.permute.xlu0 %1052
    %1054 = vrot.lane.b32.xlu0 %v998, 1
    %v1055 = vpop.permute.xlu0 %1054
    %1056 = vrot.lane.b32.xlu0 %v999, 1
    %v1057 = vpop.permute.xlu0 %1056
    %1058 = vrot.lane.b32.xlu0 %v1000, 1
    %v1059 = vpop.permute.xlu0 %1058
    %1060 = vrot.lane.b32.xlu0 %v1001, 1
    %v1061 = vpop.permute.xlu0 %1060
    %1062 = vrot.lane.b32.xlu0 %v1002, 1
    %v1063 = vpop.permute.xlu0 %1062
    %1064 = vrot.lane.b32.xlu0 %v1003, 1
    %v1065 = vpop.permute.xlu0 %1064
    %1066 = vrot.lane.b32.xlu0 %v1004, 1
    %v1067 = vpop.permute.xlu0 %1066
    %1068 = vrot.lane.b32.xlu0 %v1005, 1
    %v1069 = vpop.permute.xlu0 %1068
    %1070 = vrot.lane.b32.xlu0 %v1006, 1
    %v1071 = vpop.permute.xlu0 %1070
    %1072 = vrot.lane.b32.xlu0 %v1007, 1
    %v1073 = vpop.permute.xlu0 %1072
    %1074 = vrot.lane.b32.xlu0 %v1008, 1
    %v1075 = vpop.permute.xlu0 %1074
    %1076 = vrot.lane.b32.xlu0 %v1009, 1
    %v1077 = vpop.permute.xlu0 %1076
    %1078 = vrot.lane.b32.xlu0 %v1010, 1
    %v1079 = vpop.permute.xlu0 %1078
    %1080 = vrot.lane.b32.xlu0 %v1011, 1
    %v1081 = vpop.permute.xlu0 %1080
    %1082 = vrot.lane.b32.xlu0 %v1012, 1
    %v1083 = vpop.permute.xlu0 %1082
    %1084 = vrot.lane.b32.xlu0 %v1013, 1
    %v1085 = vpop.permute.xlu0 %1084
    %v1086 = vsel %vm545, %v1039, %v1041
    %v1087 = vsel %vm545, %v1041, %v1043
    %v1088 = vsel %vm545, %v1043, %v1045
    %v1089 = vsel %vm545, %v1045, %v1047
    %v1090 = vsel %vm545, %v1047, %v1049
    %v1091 = vsel %vm545, %v1051, %v1053
    %v1092 = vsel %vm545, %v1053, %v1055
    %v1093 = vsel %vm545, %v1055, %v1057
    %v1094 = vsel %vm545, %v1057, %v1059
    %v1095 = vsel %vm545, %v1059, %v1061
    %v1096 = vsel %vm545, %v1063, %v1065
    %v1097 = vsel %vm545, %v1065, %v1067
    %v1098 = vsel %vm545, %v1067, %v1069
    %v1099 = vsel %vm545, %v1069, %v1071
    %v1100 = vsel %vm545, %v1071, %v1073
    %v1101 = vsel %vm545, %v1075, %v1077
    %v1102 = vsel %vm545, %v1077, %v1079
    %v1103 = vsel %vm545, %v1079, %v1081
    %v1104 = vsel %vm545, %v1081, %v1083
    %v1105 = vsel %vm545, %v1083, %v1085
    %v1130 = vadd.f32 %v950, %v1039
    %v1131 = vadd.f32 %v951, %v1086
    %v1132 = vadd.f32 %v952, %v1087
    %v1133 = vadd.f32 %v953, %v1088
    %v1134 = vadd.f32 %v954, %v1089
    %v1135 = vadd.f32 %v955, %v1090
    %v1136 = vadd.f32 %v956, %v1051
    %v1137 = vadd.f32 %v957, %v1091
    %v1138 = vadd.f32 %v958, %v1092
    %v1139 = vadd.f32 %v959, %v1093
    %v1140 = vadd.f32 %v960, %v1094
    %v1141 = vadd.f32 %v961, %v1095
    %v1142 = vadd.f32 %v962, %v1063
    %v1143 = vadd.f32 %v963, %v1096
    %v1144 = vadd.f32 %v964, %v1097
    %v1145 = vadd.f32 %v965, %v1098
    %v1146 = vadd.f32 %v966, %v1099
    %v1147 = vadd.f32 %v967, %v1100
    %v1148 = vadd.f32 %v968, %v1075
    %v1149 = vadd.f32 %v969, %v1101
    %v1150 = vadd.f32 %v970, %v1102
    %v1151 = vadd.f32 %v971, %v1103
    %v1152 = vadd.f32 %v972, %v1104
    %v1153 = vadd.f32 %v973, %v1105
    %1154 = vset.pattern.permute.xlu0 8
    %1155 = vperm.xlu0 %1154, %v39
    %v1156 = vpop.permute.xlu0 %1155
    %1158 = vset.pattern.permute.xlu0 8
    %1159 = vperm.xlu0 %1158, %v40
    %v1160 = vpop.permute.xlu0 %1159
    %1162 = vset.pattern.permute.xlu0 8
    %1163 = vperm.xlu0 %1162, %v41
    %v1164 = vpop.permute.xlu0 %1163
    %1166 = vset.pattern.permute.xlu0 8
    %1167 = vperm.xlu0 %1166, %v42
    %v1168 = vpop.permute.xlu0 %1167
    %v1170 = vmul.f32 %v47, %v1156
    %v1171 = vmul.f32 %v51, %v1156
    %v1172 = vmul.f32 %v55, %v1156
    %v1173 = vmul.f32 %v59, %v1156
    %v1174 = vmul.f32 %v63, %v1156
    %v1175 = vmul.f32 %v67, %v1156
    %v1176 = vmul.f32 %v47, %v1160
    %v1177 = vmul.f32 %v51, %v1160
    %v1178 = vmul.f32 %v55, %v1160
    %v1179 = vmul.f32 %v59, %v1160
    %v1180 = vmul.f32 %v63, %v1160
    %v1181 = vmul.f32 %v67, %v1160
    %v1182 = vmul.f32 %v47, %v1164
    %v1183 = vmul.f32 %v51, %v1164
    %v1184 = vmul.f32 %v55, %v1164
    %v1185 = vmul.f32 %v59, %v1164
    %v1186 = vmul.f32 %v63, %v1164
    %v1187 = vmul.f32 %v67, %v1164
    %v1188 = vmul.f32 %v47, %v1168
    %v1189 = vmul.f32 %v51, %v1168
    %v1190 = vmul.f32 %v55, %v1168
    %v1191 = vmul.f32 %v59, %v1168
    %v1192 = vmul.f32 %v63, %v1168
    %v1193 = vmul.f32 %v67, %v1168
    %1218 = vrot.lane.b32.xlu0 %v1170, 17
    %v1219 = vpop.permute.xlu0 %1218
    %1220 = vrot.lane.b32.xlu0 %v1171, 17
    %v1221 = vpop.permute.xlu0 %1220
    %1222 = vrot.lane.b32.xlu0 %v1172, 17
    %v1223 = vpop.permute.xlu0 %1222
    %1224 = vrot.lane.b32.xlu0 %v1173, 17
    %v1225 = vpop.permute.xlu0 %1224
    %1226 = vrot.lane.b32.xlu0 %v1174, 17
    %v1227 = vpop.permute.xlu0 %1226
    %1228 = vrot.lane.b32.xlu0 %v1175, 17
    %v1229 = vpop.permute.xlu0 %1228
    %1230 = vrot.lane.b32.xlu0 %v1176, 17
    %v1231 = vpop.permute.xlu0 %1230
    %1232 = vrot.lane.b32.xlu0 %v1177, 17
    %v1233 = vpop.permute.xlu0 %1232
    %1234 = vrot.lane.b32.xlu0 %v1178, 17
    %v1235 = vpop.permute.xlu0 %1234
    %1236 = vrot.lane.b32.xlu0 %v1179, 17
    %v1237 = vpop.permute.xlu0 %1236
    %1238 = vrot.lane.b32.xlu0 %v1180, 17
    %v1239 = vpop.permute.xlu0 %1238
    %1240 = vrot.lane.b32.xlu0 %v1181, 17
    %v1241 = vpop.permute.xlu0 %1240
    %1242 = vrot.lane.b32.xlu0 %v1182, 17
    %v1243 = vpop.permute.xlu0 %1242
    %1244 = vrot.lane.b32.xlu0 %v1183, 17
    %v1245 = vpop.permute.xlu0 %1244
    %1246 = vrot.lane.b32.xlu0 %v1184, 17
    %v1247 = vpop.permute.xlu0 %1246
    %1248 = vrot.lane.b32.xlu0 %v1185, 17
    %v1249 = vpop.permute.xlu0 %1248
    %1250 = vrot.lane.b32.xlu0 %v1186, 17
    %v1251 = vpop.permute.xlu0 %1250
    %1252 = vrot.lane.b32.xlu0 %v1187, 17
    %v1253 = vpop.permute.xlu0 %1252
    %1254 = vrot.lane.b32.xlu0 %v1188, 17
    %v1255 = vpop.permute.xlu0 %1254
    %1256 = vrot.lane.b32.xlu0 %v1189, 17
    %v1257 = vpop.permute.xlu0 %1256
    %1258 = vrot.lane.b32.xlu0 %v1190, 17
    %v1259 = vpop.permute.xlu0 %1258
    %1260 = vrot.lane.b32.xlu0 %v1191, 17
    %v1261 = vpop.permute.xlu0 %1260
    %1262 = vrot.lane.b32.xlu0 %v1192, 17
    %v1263 = vpop.permute.xlu0 %1262
    %1264 = vrot.lane.b32.xlu0 %v1193, 17
    %v1265 = vpop.permute.xlu0 %1264
    %vm1266 = vcmask 138240
    %v1267 = vsel %vm1266, %v1219, %v1221
    %v1268 = vsel %vm1266, %v1221, %v1223
    %v1269 = vsel %vm1266, %v1223, %v1225
    %v1270 = vsel %vm1266, %v1225, %v1227
    %v1271 = vsel %vm1266, %v1227, %v1229
    %v1272 = vsel %vm1266, %v1231, %v1233
    %v1273 = vsel %vm1266, %v1233, %v1235
    %v1274 = vsel %vm1266, %v1235, %v1237
    %v1275 = vsel %vm1266, %v1237, %v1239
    %v1276 = vsel %vm1266, %v1239, %v1241
    %v1277 = vsel %vm1266, %v1243, %v1245
    %v1278 = vsel %vm1266, %v1245, %v1247
    %v1279 = vsel %vm1266, %v1247, %v1249
    %v1280 = vsel %vm1266, %v1249, %v1251
    %v1281 = vsel %vm1266, %v1251, %v1253
    %v1282 = vsel %vm1266, %v1255, %v1257
    %v1283 = vsel %vm1266, %v1257, %v1259
    %v1284 = vsel %vm1266, %v1259, %v1261
    %v1285 = vsel %vm1266, %v1261, %v1263
    %v1286 = vsel %vm1266, %v1263, %v1265
    %v1311 = vadd.f32 %v1130, %v1219
    %v1312 = vadd.f32 %v1131, %v1267
    %v1313 = vadd.f32 %v1132, %v1268
    %v1314 = vadd.f32 %v1133, %v1269
    %v1315 = vadd.f32 %v1134, %v1270
    %v1316 = vadd.f32 %v1135, %v1271
    %v1317 = vadd.f32 %v1136, %v1231
    %v1318 = vadd.f32 %v1137, %v1272
    %v1319 = vadd.f32 %v1138, %v1273
    %v1320 = vadd.f32 %v1139, %v1274
    %v1321 = vadd.f32 %v1140, %v1275
    %v1322 = vadd.f32 %v1141, %v1276
    %v1323 = vadd.f32 %v1142, %v1243
    %v1324 = vadd.f32 %v1143, %v1277
    %v1325 = vadd.f32 %v1144, %v1278
    %v1326 = vadd.f32 %v1145, %v1279
    %v1327 = vadd.f32 %v1146, %v1280
    %v1328 = vadd.f32 %v1147, %v1281
    %v1329 = vadd.f32 %v1148, %v1255
    %v1330 = vadd.f32 %v1149, %v1282
    %v1331 = vadd.f32 %v1150, %v1283
    %v1332 = vadd.f32 %v1151, %v1284
    %v1333 = vadd.f32 %v1152, %v1285
    %v1334 = vadd.f32 %v1153, %v1286
    %1335 = vset.pattern.permute.xlu0 9
    %1336 = vperm.xlu0 %1335, %v39
    %v1337 = vpop.permute.xlu0 %1336
    %1339 = vset.pattern.permute.xlu0 9
    %1340 = vperm.xlu0 %1339, %v40
    %v1341 = vpop.permute.xlu0 %1340
    %1343 = vset.pattern.permute.xlu0 9
    %1344 = vperm.xlu0 %1343, %v41
    %v1345 = vpop.permute.xlu0 %1344
    %1347 = vset.pattern.permute.xlu0 9
    %1348 = vperm.xlu0 %1347, %v42
    %v1349 = vpop.permute.xlu0 %1348
    %v1351 = vmul.f32 %v148, %v1337
    %v1352 = vmul.f32 %v152, %v1337
    %v1353 = vmul.f32 %v156, %v1337
    %v1354 = vmul.f32 %v160, %v1337
    %v1355 = vmul.f32 %v164, %v1337
    %v1356 = vmul.f32 %v168, %v1337
    %v1357 = vmul.f32 %v148, %v1341
    %v1358 = vmul.f32 %v152, %v1341
    %v1359 = vmul.f32 %v156, %v1341
    %v1360 = vmul.f32 %v160, %v1341
    %v1361 = vmul.f32 %v164, %v1341
    %v1362 = vmul.f32 %v168, %v1341
    %v1363 = vmul.f32 %v148, %v1345
    %v1364 = vmul.f32 %v152, %v1345
    %v1365 = vmul.f32 %v156, %v1345
    %v1366 = vmul.f32 %v160, %v1345
    %v1367 = vmul.f32 %v164, %v1345
    %v1368 = vmul.f32 %v168, %v1345
    %v1369 = vmul.f32 %v148, %v1349
    %v1370 = vmul.f32 %v152, %v1349
    %v1371 = vmul.f32 %v156, %v1349
    %v1372 = vmul.f32 %v160, %v1349
    %v1373 = vmul.f32 %v164, %v1349
    %v1374 = vmul.f32 %v168, %v1349
    %1399 = vrot.lane.b32.xlu0 %v1351, 17
    %v1400 = vpop.permute.xlu0 %1399
    %1401 = vrot.lane.b32.xlu0 %v1352, 17
    %v1402 = vpop.permute.xlu0 %1401
    %1403 = vrot.lane.b32.xlu0 %v1353, 17
    %v1404 = vpop.permute.xlu0 %1403
    %1405 = vrot.lane.b32.xlu0 %v1354, 17
    %v1406 = vpop.permute.xlu0 %1405
    %1407 = vrot.lane.b32.xlu0 %v1355, 17
    %v1408 = vpop.permute.xlu0 %1407
    %1409 = vrot.lane.b32.xlu0 %v1356, 17
    %v1410 = vpop.permute.xlu0 %1409
    %1411 = vrot.lane.b32.xlu0 %v1357, 17
    %v1412 = vpop.permute.xlu0 %1411
    %1413 = vrot.lane.b32.xlu0 %v1358, 17
    %v1414 = vpop.permute.xlu0 %1413
    %1415 = vrot.lane.b32.xlu0 %v1359, 17
    %v1416 = vpop.permute.xlu0 %1415
    %1417 = vrot.lane.b32.xlu0 %v1360, 17
    %v1418 = vpop.permute.xlu0 %1417
    %1419 = vrot.lane.b32.xlu0 %v1361, 17
    %v1420 = vpop.permute.xlu0 %1419
    %1421 = vrot.lane.b32.xlu0 %v1362, 17
    %v1422 = vpop.permute.xlu0 %1421
    %1423 = vrot.lane.b32.xlu0 %v1363, 17
    %v1424 = vpop.permute.xlu0 %1423
    %1425 = vrot.lane.b32.xlu0 %v1364, 17
    %v1426 = vpop.permute.xlu0 %1425
    %1427 = vrot.lane.b32.xlu0 %v1365, 17
    %v1428 = vpop.permute.xlu0 %1427
    %1429 = vrot.lane.b32.xlu0 %v1366, 17
    %v1430 = vpop.permute.xlu0 %1429
    %1431 = vrot.lane.b32.xlu0 %v1367, 17
    %v1432 = vpop.permute.xlu0 %1431
    %1433 = vrot.lane.b32.xlu0 %v1368, 17
    %v1434 = vpop.permute.xlu0 %1433
    %1435 = vrot.lane.b32.xlu0 %v1369, 17
    %v1436 = vpop.permute.xlu0 %1435
    %1437 = vrot.lane.b32.xlu0 %v1370, 17
    %v1438 = vpop.permute.xlu0 %1437
    %1439 = vrot.lane.b32.xlu0 %v1371, 17
    %v1440 = vpop.permute.xlu0 %1439
    %1441 = vrot.lane.b32.xlu0 %v1372, 17
    %v1442 = vpop.permute.xlu0 %1441
    %1443 = vrot.lane.b32.xlu0 %v1373, 17
    %v1444 = vpop.permute.xlu0 %1443
    %1445 = vrot.lane.b32.xlu0 %v1374, 17
    %v1446 = vpop.permute.xlu0 %1445
    %v1447 = vsel %vm1266, %v1400, %v1402
    %v1448 = vsel %vm1266, %v1402, %v1404
    %v1449 = vsel %vm1266, %v1404, %v1406
    %v1450 = vsel %vm1266, %v1406, %v1408
    %v1451 = vsel %vm1266, %v1408, %v1410
    %v1452 = vsel %vm1266, %v1412, %v1414
    %v1453 = vsel %vm1266, %v1414, %v1416
    %v1454 = vsel %vm1266, %v1416, %v1418
    %v1455 = vsel %vm1266, %v1418, %v1420
    %v1456 = vsel %vm1266, %v1420, %v1422
    %v1457 = vsel %vm1266, %v1424, %v1426
    %v1458 = vsel %vm1266, %v1426, %v1428
    %v1459 = vsel %vm1266, %v1428, %v1430
    %v1460 = vsel %vm1266, %v1430, %v1432
    %v1461 = vsel %vm1266, %v1432, %v1434
    %v1462 = vsel %vm1266, %v1436, %v1438
    %v1463 = vsel %vm1266, %v1438, %v1440
    %v1464 = vsel %vm1266, %v1440, %v1442
    %v1465 = vsel %vm1266, %v1442, %v1444
    %v1466 = vsel %vm1266, %v1444, %v1446
    %v1491 = vadd.f32 %v1311, %v1400
    %v1492 = vadd.f32 %v1312, %v1447
    %v1493 = vadd.f32 %v1313, %v1448
    %v1494 = vadd.f32 %v1314, %v1449
    %v1495 = vadd.f32 %v1315, %v1450
    %v1496 = vadd.f32 %v1316, %v1451
    %v1497 = vadd.f32 %v1317, %v1412
    %v1498 = vadd.f32 %v1318, %v1452
    %v1499 = vadd.f32 %v1319, %v1453
    %v1500 = vadd.f32 %v1320, %v1454
    %v1501 = vadd.f32 %v1321, %v1455
    %v1502 = vadd.f32 %v1322, %v1456
    %v1503 = vadd.f32 %v1323, %v1424
    %v1504 = vadd.f32 %v1324, %v1457
    %v1505 = vadd.f32 %v1325, %v1458
    %v1506 = vadd.f32 %v1326, %v1459
    %v1507 = vadd.f32 %v1327, %v1460
    %v1508 = vadd.f32 %v1328, %v1461
    %v1509 = vadd.f32 %v1329, %v1436
    %v1510 = vadd.f32 %v1330, %v1462
    %v1511 = vadd.f32 %v1331, %v1463
    %v1512 = vadd.f32 %v1332, %v1464
    %v1513 = vadd.f32 %v1333, %v1465
    %v1514 = vadd.f32 %v1334, %v1466
    %1515 = vset.pattern.permute.xlu0 10
    %1516 = vperm.xlu0 %1515, %v39
    %v1517 = vpop.permute.xlu0 %1516
    %1519 = vset.pattern.permute.xlu0 10
    %1520 = vperm.xlu0 %1519, %v40
    %v1521 = vpop.permute.xlu0 %1520
    %1523 = vset.pattern.permute.xlu0 10
    %1524 = vperm.xlu0 %1523, %v41
    %v1525 = vpop.permute.xlu0 %1524
    %1527 = vset.pattern.permute.xlu0 10
    %1528 = vperm.xlu0 %1527, %v42
    %v1529 = vpop.permute.xlu0 %1528
    %v1531 = vmul.f32 %v245, %v1517
    %v1532 = vmul.f32 %v249, %v1517
    %v1533 = vmul.f32 %v253, %v1517
    %v1534 = vmul.f32 %v257, %v1517
    %v1535 = vmul.f32 %v261, %v1517
    %v1536 = vmul.f32 %v265, %v1517
    %v1537 = vmul.f32 %v245, %v1521
    %v1538 = vmul.f32 %v249, %v1521
    %v1539 = vmul.f32 %v253, %v1521
    %v1540 = vmul.f32 %v257, %v1521
    %v1541 = vmul.f32 %v261, %v1521
    %v1542 = vmul.f32 %v265, %v1521
    %v1543 = vmul.f32 %v245, %v1525
    %v1544 = vmul.f32 %v249, %v1525
    %v1545 = vmul.f32 %v253, %v1525
    %v1546 = vmul.f32 %v257, %v1525
    %v1547 = vmul.f32 %v261, %v1525
    %v1548 = vmul.f32 %v265, %v1525
    %v1549 = vmul.f32 %v245, %v1529
    %v1550 = vmul.f32 %v249, %v1529
    %v1551 = vmul.f32 %v253, %v1529
    %v1552 = vmul.f32 %v257, %v1529
    %v1553 = vmul.f32 %v261, %v1529
    %v1554 = vmul.f32 %v265, %v1529
    %1579 = vrot.lane.b32.xlu0 %v1531, 17
    %v1580 = vpop.permute.xlu0 %1579
    %1581 = vrot.lane.b32.xlu0 %v1532, 17
    %v1582 = vpop.permute.xlu0 %1581
    %1583 = vrot.lane.b32.xlu0 %v1533, 17
    %v1584 = vpop.permute.xlu0 %1583
    %1585 = vrot.lane.b32.xlu0 %v1534, 17
    %v1586 = vpop.permute.xlu0 %1585
    %1587 = vrot.lane.b32.xlu0 %v1535, 17
    %v1588 = vpop.permute.xlu0 %1587
    %1589 = vrot.lane.b32.xlu0 %v1536, 17
    %v1590 = vpop.permute.xlu0 %1589
    %1591 = vrot.lane.b32.xlu0 %v1537, 17
    %v1592 = vpop.permute.xlu0 %1591
    %1593 = vrot.lane.b32.xlu0 %v1538, 17
    %v1594 = vpop.permute.xlu0 %1593
    %1595 = vrot.lane.b32.xlu0 %v1539, 17
    %v1596 = vpop.permute.xlu0 %1595
    %1597 = vrot.lane.b32.xlu0 %v1540, 17
    %v1598 = vpop.permute.xlu0 %1597
    %1599 = vrot.lane.b32.xlu0 %v1541, 17
    %v1600 = vpop.permute.xlu0 %1599
    %1601 = vrot.lane.b32.xlu0 %v1542, 17
    %v1602 = vpop.permute.xlu0 %1601
    %1603 = vrot.lane.b32.xlu0 %v1543, 17
    %v1604 = vpop.permute.xlu0 %1603
    %1605 = vrot.lane.b32.xlu0 %v1544, 17
    %v1606 = vpop.permute.xlu0 %1605
    %1607 = vrot.lane.b32.xlu0 %v1545, 17
    %v1608 = vpop.permute.xlu0 %1607
    %1609 = vrot.lane.b32.xlu0 %v1546, 17
    %v1610 = vpop.permute.xlu0 %1609
    %1611 = vrot.lane.b32.xlu0 %v1547, 17
    %v1612 = vpop.permute.xlu0 %1611
    %1613 = vrot.lane.b32.xlu0 %v1548, 17
    %v1614 = vpop.permute.xlu0 %1613
    %1615 = vrot.lane.b32.xlu0 %v1549, 17
    %v1616 = vpop.permute.xlu0 %1615
    %1617 = vrot.lane.b32.xlu0 %v1550, 17
    %v1618 = vpop.permute.xlu0 %1617
    %1619 = vrot.lane.b32.xlu0 %v1551, 17
    %v1620 = vpop.permute.xlu0 %1619
    %1621 = vrot.lane.b32.xlu0 %v1552, 17
    %v1622 = vpop.permute.xlu0 %1621
    %1623 = vrot.lane.b32.xlu0 %v1553, 17
    %v1624 = vpop.permute.xlu0 %1623
    %1625 = vrot.lane.b32.xlu0 %v1554, 17
    %v1626 = vpop.permute.xlu0 %1625
    %v1627 = vsel %vm1266, %v1580, %v1582
    %v1628 = vsel %vm1266, %v1582, %v1584
    %v1629 = vsel %vm1266, %v1584, %v1586
    %v1630 = vsel %vm1266, %v1586, %v1588
    %v1631 = vsel %vm1266, %v1588, %v1590
    %v1632 = vsel %vm1266, %v1592, %v1594
    %v1633 = vsel %vm1266, %v1594, %v1596
    %v1634 = vsel %vm1266, %v1596, %v1598
    %v1635 = vsel %vm1266, %v1598, %v1600
    %v1636 = vsel %vm1266, %v1600, %v1602
    %v1637 = vsel %vm1266, %v1604, %v1606
    %v1638 = vsel %vm1266, %v1606, %v1608
    %v1639 = vsel %vm1266, %v1608, %v1610
    %v1640 = vsel %vm1266, %v1610, %v1612
    %v1641 = vsel %vm1266, %v1612, %v1614
    %v1642 = vsel %vm1266, %v1616, %v1618
    %v1643 = vsel %vm1266, %v1618, %v1620
    %v1644 = vsel %vm1266, %v1620, %v1622
    %v1645 = vsel %vm1266, %v1622, %v1624
    %v1646 = vsel %vm1266, %v1624, %v1626
    %v1671 = vadd.f32 %v1491, %v1580
    %v1672 = vadd.f32 %v1492, %v1627
    %v1673 = vadd.f32 %v1493, %v1628
    %v1674 = vadd.f32 %v1494, %v1629
    %v1675 = vadd.f32 %v1495, %v1630
    %v1676 = vadd.f32 %v1496, %v1631
    %v1677 = vadd.f32 %v1497, %v1592
    %v1678 = vadd.f32 %v1498, %v1632
    %v1679 = vadd.f32 %v1499, %v1633
    %v1680 = vadd.f32 %v1500, %v1634
    %v1681 = vadd.f32 %v1501, %v1635
    %v1682 = vadd.f32 %v1502, %v1636
    %v1683 = vadd.f32 %v1503, %v1604
    %v1684 = vadd.f32 %v1504, %v1637
    %v1685 = vadd.f32 %v1505, %v1638
    %v1686 = vadd.f32 %v1506, %v1639
    %v1687 = vadd.f32 %v1507, %v1640
    %v1688 = vadd.f32 %v1508, %v1641
    %v1689 = vadd.f32 %v1509, %v1616
    %v1690 = vadd.f32 %v1510, %v1642
    %v1691 = vadd.f32 %v1511, %v1643
    %v1692 = vadd.f32 %v1512, %v1644
    %v1693 = vadd.f32 %v1513, %v1645
    %v1694 = vadd.f32 %v1514, %v1646
    %1695 = vset.pattern.permute.xlu0 11
    %1696 = vperm.xlu0 %1695, %v39
    %v1697 = vpop.permute.xlu0 %1696
    %1699 = vset.pattern.permute.xlu0 11
    %1700 = vperm.xlu0 %1699, %v40
    %v1701 = vpop.permute.xlu0 %1700
    %1703 = vset.pattern.permute.xlu0 11
    %1704 = vperm.xlu0 %1703, %v41
    %v1705 = vpop.permute.xlu0 %1704
    %1707 = vset.pattern.permute.xlu0 11
    %1708 = vperm.xlu0 %1707, %v42
    %v1709 = vpop.permute.xlu0 %1708
    %v1711 = vmul.f32 %v342, %v1697
    %v1712 = vmul.f32 %v346, %v1697
    %v1713 = vmul.f32 %v350, %v1697
    %v1714 = vmul.f32 %v354, %v1697
    %v1715 = vmul.f32 %v358, %v1697
    %v1716 = vmul.f32 %v362, %v1697
    %v1717 = vmul.f32 %v342, %v1701
    %v1718 = vmul.f32 %v346, %v1701
    %v1719 = vmul.f32 %v350, %v1701
    %v1720 = vmul.f32 %v354, %v1701
    %v1721 = vmul.f32 %v358, %v1701
    %v1722 = vmul.f32 %v362, %v1701
    %v1723 = vmul.f32 %v342, %v1705
    %v1724 = vmul.f32 %v346, %v1705
    %v1725 = vmul.f32 %v350, %v1705
    %v1726 = vmul.f32 %v354, %v1705
    %v1727 = vmul.f32 %v358, %v1705
    %v1728 = vmul.f32 %v362, %v1705
    %v1729 = vmul.f32 %v342, %v1709
    %v1730 = vmul.f32 %v346, %v1709
    %v1731 = vmul.f32 %v350, %v1709
    %v1732 = vmul.f32 %v354, %v1709
    %v1733 = vmul.f32 %v358, %v1709
    %v1734 = vmul.f32 %v362, %v1709
    %1759 = vrot.lane.b32.xlu0 %v1711, 17
    %v1760 = vpop.permute.xlu0 %1759
    %1761 = vrot.lane.b32.xlu0 %v1712, 17
    %v1762 = vpop.permute.xlu0 %1761
    %1763 = vrot.lane.b32.xlu0 %v1713, 17
    %v1764 = vpop.permute.xlu0 %1763
    %1765 = vrot.lane.b32.xlu0 %v1714, 17
    %v1766 = vpop.permute.xlu0 %1765
    %1767 = vrot.lane.b32.xlu0 %v1715, 17
    %v1768 = vpop.permute.xlu0 %1767
    %1769 = vrot.lane.b32.xlu0 %v1716, 17
    %v1770 = vpop.permute.xlu0 %1769
    %1771 = vrot.lane.b32.xlu0 %v1717, 17
    %v1772 = vpop.permute.xlu0 %1771
    %1773 = vrot.lane.b32.xlu0 %v1718, 17
    %v1774 = vpop.permute.xlu0 %1773
    %1775 = vrot.lane.b32.xlu0 %v1719, 17
    %v1776 = vpop.permute.xlu0 %1775
    %1777 = vrot.lane.b32.xlu0 %v1720, 17
    %v1778 = vpop.permute.xlu0 %1777
    %1779 = vrot.lane.b32.xlu0 %v1721, 17
    %v1780 = vpop.permute.xlu0 %1779
    %1781 = vrot.lane.b32.xlu0 %v1722, 17
    %v1782 = vpop.permute.xlu0 %1781
    %1783 = vrot.lane.b32.xlu0 %v1723, 17
    %v1784 = vpop.permute.xlu0 %1783
    %1785 = vrot.lane.b32.xlu0 %v1724, 17
    %v1786 = vpop.permute.xlu0 %1785
    %1787 = vrot.lane.b32.xlu0 %v1725, 17
    %v1788 = vpop.permute.xlu0 %1787
    %1789 = vrot.lane.b32.xlu0 %v1726, 17
    %v1790 = vpop.permute.xlu0 %1789
    %1791 = vrot.lane.b32.xlu0 %v1727, 17
    %v1792 = vpop.permute.xlu0 %1791
    %1793 = vrot.lane.b32.xlu0 %v1728, 17
    %v1794 = vpop.permute.xlu0 %1793
    %1795 = vrot.lane.b32.xlu0 %v1729, 17
    %v1796 = vpop.permute.xlu0 %1795
    %1797 = vrot.lane.b32.xlu0 %v1730, 17
    %v1798 = vpop.permute.xlu0 %1797
    %1799 = vrot.lane.b32.xlu0 %v1731, 17
    %v1800 = vpop.permute.xlu0 %1799
    %1801 = vrot.lane.b32.xlu0 %v1732, 17
    %v1802 = vpop.permute.xlu0 %1801
    %1803 = vrot.lane.b32.xlu0 %v1733, 17
    %v1804 = vpop.permute.xlu0 %1803
    %1805 = vrot.lane.b32.xlu0 %v1734, 17
    %v1806 = vpop.permute.xlu0 %1805
    %v1807 = vsel %vm1266, %v1760, %v1762
    %v1808 = vsel %vm1266, %v1762, %v1764
    %v1809 = vsel %vm1266, %v1764, %v1766
    %v1810 = vsel %vm1266, %v1766, %v1768
    %v1811 = vsel %vm1266, %v1768, %v1770
    %v1812 = vsel %vm1266, %v1772, %v1774
    %v1813 = vsel %vm1266, %v1774, %v1776
    %v1814 = vsel %vm1266, %v1776, %v1778
    %v1815 = vsel %vm1266, %v1778, %v1780
    %v1816 = vsel %vm1266, %v1780, %v1782
    %v1817 = vsel %vm1266, %v1784, %v1786
    %v1818 = vsel %vm1266, %v1786, %v1788
    %v1819 = vsel %vm1266, %v1788, %v1790
    %v1820 = vsel %vm1266, %v1790, %v1792
    %v1821 = vsel %vm1266, %v1792, %v1794
    %v1822 = vsel %vm1266, %v1796, %v1798
    %v1823 = vsel %vm1266, %v1798, %v1800
    %v1824 = vsel %vm1266, %v1800, %v1802
    %v1825 = vsel %vm1266, %v1802, %v1804
    %v1826 = vsel %vm1266, %v1804, %v1806
    %v1851 = vadd.f32 %v1671, %v1760
    %v1852 = vadd.f32 %v1672, %v1807
    %v1853 = vadd.f32 %v1673, %v1808
    %v1854 = vadd.f32 %v1674, %v1809
    %v1855 = vadd.f32 %v1675, %v1810
    %v1856 = vadd.f32 %v1676, %v1811
    %v1857 = vadd.f32 %v1677, %v1772
    %v1858 = vadd.f32 %v1678, %v1812
    %v1859 = vadd.f32 %v1679, %v1813
    %v1860 = vadd.f32 %v1680, %v1814
    %v1861 = vadd.f32 %v1681, %v1815
    %v1862 = vadd.f32 %v1682, %v1816
    %v1863 = vadd.f32 %v1683, %v1784
    %v1864 = vadd.f32 %v1684, %v1817
    %v1865 = vadd.f32 %v1685, %v1818
    %v1866 = vadd.f32 %v1686, %v1819
    %v1867 = vadd.f32 %v1687, %v1820
    %v1868 = vadd.f32 %v1688, %v1821
    %v1869 = vadd.f32 %v1689, %v1796
    %v1870 = vadd.f32 %v1690, %v1822
    %v1871 = vadd.f32 %v1691, %v1823
    %v1872 = vadd.f32 %v1692, %v1824
    %v1873 = vadd.f32 %v1693, %v1825
    %v1874 = vadd.f32 %v1694, %v1826
    %v1875 = vld [vmem:[%s0] ss:$4 sm:$0x1f]
    %v1877 = vlaneseq
    %v1878 = vshrl.u32 %v1877, 7
    %v1879 = vsub.s32 0, %v1878
    %v1880 = vrot.slane %v1875, %v1879
    %v1881 = vlaneseq
    %v1882 = vshrl.u32 %v1881, 7
    %v1883 = vsub.s32 1, %v1882
    %v1884 = vrot.slane %v1875, %v1883
    %v1885 = vlaneseq
    %v1886 = vshrl.u32 %v1885, 7
    %v1887 = vsub.s32 2, %v1886
    %v1888 = vrot.slane %v1875, %v1887
    %v1889 = vlaneseq
    %v1890 = vshrl.u32 %v1889, 7
    %v1891 = vsub.s32 3, %v1890
    %v1892 = vrot.slane %v1875, %v1891
    %v1893 = vlaneseq
    %v1894 = vshrl.u32 %v1893, 7
    %v1895 = vsub.s32 4, %v1894
    %v1896 = vrot.slane %v1875, %v1895
    %1902 = vset.pattern.permute.xlu0 12
    %1903 = vperm.xlu0 %1902, %v39
    %v1904 = vpop.permute.xlu0 %1903
    %1906 = vset.pattern.permute.xlu0 12
    %1907 = vperm.xlu0 %1906, %v40
    %v1908 = vpop.permute.xlu0 %1907
    %1910 = vset.pattern.permute.xlu0 12
    %1911 = vperm.xlu0 %1910, %v41
    %v1912 = vpop.permute.xlu0 %1911
    %1914 = vset.pattern.permute.xlu0 12
    %1915 = vperm.xlu0 %1914, %v42
    %v1916 = vpop.permute.xlu0 %1915
    %v1918 = vmul.f32 %v1880, %v1904
    %v1919 = vmul.f32 %v1884, %v1904
    %v1920 = vmul.f32 %v1888, %v1904
    %v1921 = vmul.f32 %v1892, %v1904
    %v1922 = vmul.f32 %v1896, %v1904
    %v1923 = vmul.f32 %v1880, %v1908
    %v1924 = vmul.f32 %v1884, %v1908
    %v1925 = vmul.f32 %v1888, %v1908
    %v1926 = vmul.f32 %v1892, %v1908
    %v1927 = vmul.f32 %v1896, %v1908
    %v1928 = vmul.f32 %v1880, %v1912
    %v1929 = vmul.f32 %v1884, %v1912
    %v1930 = vmul.f32 %v1888, %v1912
    %v1931 = vmul.f32 %v1892, %v1912
    %v1932 = vmul.f32 %v1896, %v1912
    %v1933 = vmul.f32 %v1880, %v1916
    %v1934 = vmul.f32 %v1884, %v1916
    %v1935 = vmul.f32 %v1888, %v1916
    %v1936 = vmul.f32 %v1892, %v1916
    %v1937 = vmul.f32 %v1896, %v1916
    %1958 = vrot.lane.b32.xlu0 %v1918, 18
    %v1959 = vpop.permute.xlu0 %1958
    %1960 = vrot.lane.b32.xlu0 %v1919, 18
    %v1961 = vpop.permute.xlu0 %1960
    %1962 = vrot.lane.b32.xlu0 %v1920, 18
    %v1963 = vpop.permute.xlu0 %1962
    %1964 = vrot.lane.b32.xlu0 %v1921, 18
    %v1965 = vpop.permute.xlu0 %1964
    %1966 = vrot.lane.b32.xlu0 %v1922, 18
    %v1967 = vpop.permute.xlu0 %1966
    %1968 = vrot.lane.b32.xlu0 %v1923, 18
    %v1969 = vpop.permute.xlu0 %1968
    %1970 = vrot.lane.b32.xlu0 %v1924, 18
    %v1971 = vpop.permute.xlu0 %1970
    %1972 = vrot.lane.b32.xlu0 %v1925, 18
    %v1973 = vpop.permute.xlu0 %1972
    %1974 = vrot.lane.b32.xlu0 %v1926, 18
    %v1975 = vpop.permute.xlu0 %1974
    %1976 = vrot.lane.b32.xlu0 %v1927, 18
    %v1977 = vpop.permute.xlu0 %1976
    %1978 = vrot.lane.b32.xlu0 %v1928, 18
    %v1979 = vpop.permute.xlu0 %1978
    %1980 = vrot.lane.b32.xlu0 %v1929, 18
    %v1981 = vpop.permute.xlu0 %1980
    %1982 = vrot.lane.b32.xlu0 %v1930, 18
    %v1983 = vpop.permute.xlu0 %1982
    %1984 = vrot.lane.b32.xlu0 %v1931, 18
    %v1985 = vpop.permute.xlu0 %1984
    %1986 = vrot.lane.b32.xlu0 %v1932, 18
    %v1987 = vpop.permute.xlu0 %1986
    %1988 = vrot.lane.b32.xlu0 %v1933, 18
    %v1989 = vpop.permute.xlu0 %1988
    %1990 = vrot.lane.b32.xlu0 %v1934, 18
    %v1991 = vpop.permute.xlu0 %1990
    %1992 = vrot.lane.b32.xlu0 %v1935, 18
    %v1993 = vpop.permute.xlu0 %1992
    %1994 = vrot.lane.b32.xlu0 %v1936, 18
    %v1995 = vpop.permute.xlu0 %1994
    %1996 = vrot.lane.b32.xlu0 %v1937, 18
    %v1997 = vpop.permute.xlu0 %1996
    %vm1998 = vcmask 146432
    %v1999 = vsel %vm1998, %v1959, %v1961
    %v2000 = vsel %vm1998, %v1961, %v1963
    %v2001 = vsel %vm1998, %v1963, %v1965
    %v2002 = vsel %vm1998, %v1965, %v1967
    %v2003 = vsel %vm1998, %v1969, %v1971
    %v2004 = vsel %vm1998, %v1971, %v1973
    %v2005 = vsel %vm1998, %v1973, %v1975
    %v2006 = vsel %vm1998, %v1975, %v1977
    %v2007 = vsel %vm1998, %v1979, %v1981
    %v2008 = vsel %vm1998, %v1981, %v1983
    %v2009 = vsel %vm1998, %v1983, %v1985
    %v2010 = vsel %vm1998, %v1985, %v1987
    %v2011 = vsel %vm1998, %v1989, %v1991
    %v2012 = vsel %vm1998, %v1991, %v1993
    %v2013 = vsel %vm1998, %v1993, %v1995
    %v2014 = vsel %vm1998, %v1995, %v1997
    %v2039 = vadd.f32 %v1851, %v1959
    %v2040 = vadd.f32 %v1852, %v1999
    %v2041 = vadd.f32 %v1853, %v2000
    %v2042 = vadd.f32 %v1854, %v2001
    %v2043 = vadd.f32 %v1855, %v2002
    %v2044 = vadd.f32 %v1856, %v1967
    %v2045 = vadd.f32 %v1857, %v1969
    %v2046 = vadd.f32 %v1858, %v2003
    %v2047 = vadd.f32 %v1859, %v2004
    %v2048 = vadd.f32 %v1860, %v2005
    %v2049 = vadd.f32 %v1861, %v2006
    %v2050 = vadd.f32 %v1862, %v1977
    %v2051 = vadd.f32 %v1863, %v1979
    %v2052 = vadd.f32 %v1864, %v2007
    %v2053 = vadd.f32 %v1865, %v2008
    %v2054 = vadd.f32 %v1866, %v2009
    %v2055 = vadd.f32 %v1867, %v2010
    %v2056 = vadd.f32 %v1868, %v1987
    %v2057 = vadd.f32 %v1869, %v1989
    %v2058 = vadd.f32 %v1870, %v2011
    %v2059 = vadd.f32 %v1871, %v2012
    %v2060 = vadd.f32 %v1872, %v2013
    %v2061 = vadd.f32 %v1873, %v2014
    %v2062 = vadd.f32 %v1874, %v1997
    %v2063 = vld [vmem:[%s142] ss:$4 sm:$0x1f]
    %v2065 = vlaneseq
    %v2066 = vshrl.u32 %v2065, 7
    %v2067 = vsub.s32 0, %v2066
    %v2068 = vrot.slane %v2063, %v2067
    %v2069 = vlaneseq
    %v2070 = vshrl.u32 %v2069, 7
    %v2071 = vsub.s32 1, %v2070
    %v2072 = vrot.slane %v2063, %v2071
    %v2073 = vlaneseq
    %v2074 = vshrl.u32 %v2073, 7
    %v2075 = vsub.s32 2, %v2074
    %v2076 = vrot.slane %v2063, %v2075
    %v2077 = vlaneseq
    %v2078 = vshrl.u32 %v2077, 7
    %v2079 = vsub.s32 3, %v2078
    %v2080 = vrot.slane %v2063, %v2079
    %v2081 = vlaneseq
    %v2082 = vshrl.u32 %v2081, 7
    %v2083 = vsub.s32 4, %v2082
    %v2084 = vrot.slane %v2063, %v2083
    %2090 = vset.pattern.permute.xlu0 13
    %2091 = vperm.xlu0 %2090, %v39
    %v2092 = vpop.permute.xlu0 %2091
    %2094 = vset.pattern.permute.xlu0 13
    %2095 = vperm.xlu0 %2094, %v40
    %v2096 = vpop.permute.xlu0 %2095
    %2098 = vset.pattern.permute.xlu0 13
    %2099 = vperm.xlu0 %2098, %v41
    %v2100 = vpop.permute.xlu0 %2099
    %2102 = vset.pattern.permute.xlu0 13
    %2103 = vperm.xlu0 %2102, %v42
    %v2104 = vpop.permute.xlu0 %2103
    %v2106 = vmul.f32 %v2068, %v2092
    %v2107 = vmul.f32 %v2072, %v2092
    %v2108 = vmul.f32 %v2076, %v2092
    %v2109 = vmul.f32 %v2080, %v2092
    %v2110 = vmul.f32 %v2084, %v2092
    %v2111 = vmul.f32 %v2068, %v2096
    %v2112 = vmul.f32 %v2072, %v2096
    %v2113 = vmul.f32 %v2076, %v2096
    %v2114 = vmul.f32 %v2080, %v2096
    %v2115 = vmul.f32 %v2084, %v2096
    %v2116 = vmul.f32 %v2068, %v2100
    %v2117 = vmul.f32 %v2072, %v2100
    %v2118 = vmul.f32 %v2076, %v2100
    %v2119 = vmul.f32 %v2080, %v2100
    %v2120 = vmul.f32 %v2084, %v2100
    %v2121 = vmul.f32 %v2068, %v2104
    %v2122 = vmul.f32 %v2072, %v2104
    %v2123 = vmul.f32 %v2076, %v2104
    %v2124 = vmul.f32 %v2080, %v2104
    %v2125 = vmul.f32 %v2084, %v2104
    %2146 = vrot.lane.b32.xlu0 %v2106, 18
    %v2147 = vpop.permute.xlu0 %2146
    %2148 = vrot.lane.b32.xlu0 %v2107, 18
    %v2149 = vpop.permute.xlu0 %2148
    %2150 = vrot.lane.b32.xlu0 %v2108, 18
    %v2151 = vpop.permute.xlu0 %2150
    %2152 = vrot.lane.b32.xlu0 %v2109, 18
    %v2153 = vpop.permute.xlu0 %2152
    %2154 = vrot.lane.b32.xlu0 %v2110, 18
    %v2155 = vpop.permute.xlu0 %2154
    %2156 = vrot.lane.b32.xlu0 %v2111, 18
    %v2157 = vpop.permute.xlu0 %2156
    %2158 = vrot.lane.b32.xlu0 %v2112, 18
    %v2159 = vpop.permute.xlu0 %2158
    %2160 = vrot.lane.b32.xlu0 %v2113, 18
    %v2161 = vpop.permute.xlu0 %2160
    %2162 = vrot.lane.b32.xlu0 %v2114, 18
    %v2163 = vpop.permute.xlu0 %2162
    %2164 = vrot.lane.b32.xlu0 %v2115, 18
    %v2165 = vpop.permute.xlu0 %2164
    %2166 = vrot.lane.b32.xlu0 %v2116, 18
    %v2167 = vpop.permute.xlu0 %2166
    %2168 = vrot.lane.b32.xlu0 %v2117, 18
    %v2169 = vpop.permute.xlu0 %2168
    %2170 = vrot.lane.b32.xlu0 %v2118, 18
    %v2171 = vpop.permute.xlu0 %2170
    %2172 = vrot.lane.b32.xlu0 %v2119, 18
    %v2173 = vpop.permute.xlu0 %2172
    %2174 = vrot.lane.b32.xlu0 %v2120, 18
    %v2175 = vpop.permute.xlu0 %2174
    %2176 = vrot.lane.b32.xlu0 %v2121, 18
    %v2177 = vpop.permute.xlu0 %2176
    %2178 = vrot.lane.b32.xlu0 %v2122, 18
    %v2179 = vpop.permute.xlu0 %2178
    %2180 = vrot.lane.b32.xlu0 %v2123, 18
    %v2181 = vpop.permute.xlu0 %2180
    %2182 = vrot.lane.b32.xlu0 %v2124, 18
    %v2183 = vpop.permute.xlu0 %2182
    %2184 = vrot.lane.b32.xlu0 %v2125, 18
    %v2185 = vpop.permute.xlu0 %2184
    %v2186 = vsel %vm1998, %v2147, %v2149
    %v2187 = vsel %vm1998, %v2149, %v2151
    %v2188 = vsel %vm1998, %v2151, %v2153
    %v2189 = vsel %vm1998, %v2153, %v2155
    %v2190 = vsel %vm1998, %v2157, %v2159
    %v2191 = vsel %vm1998, %v2159, %v2161
    %v2192 = vsel %vm1998, %v2161, %v2163
    %v2193 = vsel %vm1998, %v2163, %v2165
    %v2194 = vsel %vm1998, %v2167, %v2169
    %v2195 = vsel %vm1998, %v2169, %v2171
    %v2196 = vsel %vm1998, %v2171, %v2173
    %v2197 = vsel %vm1998, %v2173, %v2175
    %v2198 = vsel %vm1998, %v2177, %v2179
    %v2199 = vsel %vm1998, %v2179, %v2181
    %v2200 = vsel %vm1998, %v2181, %v2183
    %v2201 = vsel %vm1998, %v2183, %v2185
    %v2226 = vadd.f32 %v2039, %v2147
    %v2227 = vadd.f32 %v2040, %v2186
    %v2228 = vadd.f32 %v2041, %v2187
    %v2229 = vadd.f32 %v2042, %v2188
    %v2230 = vadd.f32 %v2043, %v2189
    %v2231 = vadd.f32 %v2044, %v2155
    %v2232 = vadd.f32 %v2045, %v2157
    %v2233 = vadd.f32 %v2046, %v2190
    %v2234 = vadd.f32 %v2047, %v2191
    %v2235 = vadd.f32 %v2048, %v2192
    %v2236 = vadd.f32 %v2049, %v2193
    %v2237 = vadd.f32 %v2050, %v2165
    %v2238 = vadd.f32 %v2051, %v2167
    %v2239 = vadd.f32 %v2052, %v2194
    %v2240 = vadd.f32 %v2053, %v2195
    %v2241 = vadd.f32 %v2054, %v2196
    %v2242 = vadd.f32 %v2055, %v2197
    %v2243 = vadd.f32 %v2056, %v2175
    %v2244 = vadd.f32 %v2057, %v2177
    %v2245 = vadd.f32 %v2058, %v2198
    %v2246 = vadd.f32 %v2059, %v2199
    %v2247 = vadd.f32 %v2060, %v2200
    %v2248 = vadd.f32 %v2061, %v2201
    %v2249 = vadd.f32 %v2062, %v2185
    %v2250 = vld [vmem:[%s239] ss:$4 sm:$0x1f]
    %v2252 = vlaneseq
    %v2253 = vshrl.u32 %v2252, 7
    %v2254 = vsub.s32 0, %v2253
    %v2255 = vrot.slane %v2250, %v2254
    %v2256 = vlaneseq
    %v2257 = vshrl.u32 %v2256, 7
    %v2258 = vsub.s32 1, %v2257
    %v2259 = vrot.slane %v2250, %v2258
    %v2260 = vlaneseq
    %v2261 = vshrl.u32 %v2260, 7
    %v2262 = vsub.s32 2, %v2261
    %v2263 = vrot.slane %v2250, %v2262
    %v2264 = vlaneseq
    %v2265 = vshrl.u32 %v2264, 7
    %v2266 = vsub.s32 3, %v2265
    %v2267 = vrot.slane %v2250, %v2266
    %v2268 = vlaneseq
    %v2269 = vshrl.u32 %v2268, 7
    %v2270 = vsub.s32 4, %v2269
    %v2271 = vrot.slane %v2250, %v2270
    %2277 = vset.pattern.permute.xlu0 14
    %2278 = vperm.xlu0 %2277, %v39
    %v2279 = vpop.permute.xlu0 %2278
    %2281 = vset.pattern.permute.xlu0 14
    %2282 = vperm.xlu0 %2281, %v40
    %v2283 = vpop.permute.xlu0 %2282
    %2285 = vset.pattern.permute.xlu0 14
    %2286 = vperm.xlu0 %2285, %v41
    %v2287 = vpop.permute.xlu0 %2286
    %2289 = vset.pattern.permute.xlu0 14
    %2290 = vperm.xlu0 %2289, %v42
    %v2291 = vpop.permute.xlu0 %2290
    %v2293 = vmul.f32 %v2255, %v2279
    %v2294 = vmul.f32 %v2259, %v2279
    %v2295 = vmul.f32 %v2263, %v2279
    %v2296 = vmul.f32 %v2267, %v2279
    %v2297 = vmul.f32 %v2271, %v2279
    %v2298 = vmul.f32 %v2255, %v2283
    %v2299 = vmul.f32 %v2259, %v2283
    %v2300 = vmul.f32 %v2263, %v2283
    %v2301 = vmul.f32 %v2267, %v2283
    %v2302 = vmul.f32 %v2271, %v2283
    %v2303 = vmul.f32 %v2255, %v2287
    %v2304 = vmul.f32 %v2259, %v2287
    %v2305 = vmul.f32 %v2263, %v2287
    %v2306 = vmul.f32 %v2267, %v2287
    %v2307 = vmul.f32 %v2271, %v2287
    %v2308 = vmul.f32 %v2255, %v2291
    %v2309 = vmul.f32 %v2259, %v2291
    %v2310 = vmul.f32 %v2263, %v2291
    %v2311 = vmul.f32 %v2267, %v2291
    %v2312 = vmul.f32 %v2271, %v2291
    %2333 = vrot.lane.b32.xlu0 %v2293, 18
    %v2334 = vpop.permute.xlu0 %2333
    %2335 = vrot.lane.b32.xlu0 %v2294, 18
    %v2336 = vpop.permute.xlu0 %2335
    %2337 = vrot.lane.b32.xlu0 %v2295, 18
    %v2338 = vpop.permute.xlu0 %2337
    %2339 = vrot.lane.b32.xlu0 %v2296, 18
    %v2340 = vpop.permute.xlu0 %2339
    %2341 = vrot.lane.b32.xlu0 %v2297, 18
    %v2342 = vpop.permute.xlu0 %2341
    %2343 = vrot.lane.b32.xlu0 %v2298, 18
    %v2344 = vpop.permute.xlu0 %2343
    %2345 = vrot.lane.b32.xlu0 %v2299, 18
    %v2346 = vpop.permute.xlu0 %2345
    %2347 = vrot.lane.b32.xlu0 %v2300, 18
    %v2348 = vpop.permute.xlu0 %2347
    %2349 = vrot.lane.b32.xlu0 %v2301, 18
    %v2350 = vpop.permute.xlu0 %2349
    %2351 = vrot.lane.b32.xlu0 %v2302, 18
    %v2352 = vpop.permute.xlu0 %2351
    %2353 = vrot.lane.b32.xlu0 %v2303, 18
    %v2354 = vpop.permute.xlu0 %2353
    %2355 = vrot.lane.b32.xlu0 %v2304, 18
    %v2356 = vpop.permute.xlu0 %2355
    %2357 = vrot.lane.b32.xlu0 %v2305, 18
    %v2358 = vpop.permute.xlu0 %2357
    %2359 = vrot.lane.b32.xlu0 %v2306, 18
    %v2360 = vpop.permute.xlu0 %2359
    %2361 = vrot.lane.b32.xlu0 %v2307, 18
    %v2362 = vpop.permute.xlu0 %2361
    %2363 = vrot.lane.b32.xlu0 %v2308, 18
    %v2364 = vpop.permute.xlu0 %2363
    %2365 = vrot.lane.b32.xlu0 %v2309, 18
    %v2366 = vpop.permute.xlu0 %2365
    %2367 = vrot.lane.b32.xlu0 %v2310, 18
    %v2368 = vpop.permute.xlu0 %2367
    %2369 = vrot.lane.b32.xlu0 %v2311, 18
    %v2370 = vpop.permute.xlu0 %2369
    %2371 = vrot.lane.b32.xlu0 %v2312, 18
    %v2372 = vpop.permute.xlu0 %2371
    %v2373 = vsel %vm1998, %v2334, %v2336
    %v2374 = vsel %vm1998, %v2336, %v2338
    %v2375 = vsel %vm1998, %v2338, %v2340
    %v2376 = vsel %vm1998, %v2340, %v2342
    %v2377 = vsel %vm1998, %v2344, %v2346
    %v2378 = vsel %vm1998, %v2346, %v2348
    %v2379 = vsel %vm1998, %v2348, %v2350
    %v2380 = vsel %vm1998, %v2350, %v2352
    %v2381 = vsel %vm1998, %v2354, %v2356
    %v2382 = vsel %vm1998, %v2356, %v2358
    %v2383 = vsel %vm1998, %v2358, %v2360
    %v2384 = vsel %vm1998, %v2360, %v2362
    %v2385 = vsel %vm1998, %v2364, %v2366
    %v2386 = vsel %vm1998, %v2366, %v2368
    %v2387 = vsel %vm1998, %v2368, %v2370
    %v2388 = vsel %vm1998, %v2370, %v2372
    %v2413 = vadd.f32 %v2226, %v2334
    %v2414 = vadd.f32 %v2227, %v2373
    %v2415 = vadd.f32 %v2228, %v2374
    %v2416 = vadd.f32 %v2229, %v2375
    %v2417 = vadd.f32 %v2230, %v2376
    %v2418 = vadd.f32 %v2231, %v2342
    %v2419 = vadd.f32 %v2232, %v2344
    %v2420 = vadd.f32 %v2233, %v2377
    %v2421 = vadd.f32 %v2234, %v2378
    %v2422 = vadd.f32 %v2235, %v2379
    %v2423 = vadd.f32 %v2236, %v2380
    %v2424 = vadd.f32 %v2237, %v2352
    %v2425 = vadd.f32 %v2238, %v2354
    %v2426 = vadd.f32 %v2239, %v2381
    %v2427 = vadd.f32 %v2240, %v2382
    %v2428 = vadd.f32 %v2241, %v2383
    %v2429 = vadd.f32 %v2242, %v2384
    %v2430 = vadd.f32 %v2243, %v2362
    %v2431 = vadd.f32 %v2244, %v2364
    %v2432 = vadd.f32 %v2245, %v2385
    %v2433 = vadd.f32 %v2246, %v2386
    %v2434 = vadd.f32 %v2247, %v2387
    %v2435 = vadd.f32 %v2248, %v2388
    %v2436 = vadd.f32 %v2249, %v2372
    %v2437 = vld [vmem:[%s336] ss:$4 sm:$0x1f]
    %v2439 = vlaneseq
    %v2440 = vshrl.u32 %v2439, 7
    %v2441 = vsub.s32 0, %v2440
    %v2442 = vrot.slane %v2437, %v2441
    %v2443 = vlaneseq
    %v2444 = vshrl.u32 %v2443, 7
    %v2445 = vsub.s32 1, %v2444
    %v2446 = vrot.slane %v2437, %v2445
    %v2447 = vlaneseq
    %v2448 = vshrl.u32 %v2447, 7
    %v2449 = vsub.s32 2, %v2448
    %v2450 = vrot.slane %v2437, %v2449
    %v2451 = vlaneseq
    %v2452 = vshrl.u32 %v2451, 7
    %v2453 = vsub.s32 3, %v2452
    %v2454 = vrot.slane %v2437, %v2453
    %v2455 = vlaneseq
    %v2456 = vshrl.u32 %v2455, 7
    %v2457 = vsub.s32 4, %v2456
    %v2458 = vrot.slane %v2437, %v2457
    %2464 = vset.pattern.permute.xlu0 15
    %2465 = vperm.xlu0 %2464, %v39
    %v2466 = vpop.permute.xlu0 %2465
    %2468 = vset.pattern.permute.xlu0 15
    %2469 = vperm.xlu0 %2468, %v40
    %v2470 = vpop.permute.xlu0 %2469
    %2472 = vset.pattern.permute.xlu0 15
    %2473 = vperm.xlu0 %2472, %v41
    %v2474 = vpop.permute.xlu0 %2473
    %2476 = vset.pattern.permute.xlu0 15
    %2477 = vperm.xlu0 %2476, %v42
    %v2478 = vpop.permute.xlu0 %2477
    %v2480 = vmul.f32 %v2442, %v2466
    %v2481 = vmul.f32 %v2446, %v2466
    %v2482 = vmul.f32 %v2450, %v2466
    %v2483 = vmul.f32 %v2454, %v2466
    %v2484 = vmul.f32 %v2458, %v2466
    %v2485 = vmul.f32 %v2442, %v2470
    %v2486 = vmul.f32 %v2446, %v2470
    %v2487 = vmul.f32 %v2450, %v2470
    %v2488 = vmul.f32 %v2454, %v2470
    %v2489 = vmul.f32 %v2458, %v2470
    %v2490 = vmul.f32 %v2442, %v2474
    %v2491 = vmul.f32 %v2446, %v2474
    %v2492 = vmul.f32 %v2450, %v2474
    %v2493 = vmul.f32 %v2454, %v2474
    %v2494 = vmul.f32 %v2458, %v2474
    %v2495 = vmul.f32 %v2442, %v2478
    %v2496 = vmul.f32 %v2446, %v2478
    %v2497 = vmul.f32 %v2450, %v2478
    %v2498 = vmul.f32 %v2454, %v2478
    %v2499 = vmul.f32 %v2458, %v2478
    %2520 = vrot.lane.b32.xlu0 %v2480, 18
    %v2521 = vpop.permute.xlu0 %2520
    %2522 = vrot.lane.b32.xlu0 %v2481, 18
    %v2523 = vpop.permute.xlu0 %2522
    %2524 = vrot.lane.b32.xlu0 %v2482, 18
    %v2525 = vpop.permute.xlu0 %2524
    %2526 = vrot.lane.b32.xlu0 %v2483, 18
    %v2527 = vpop.permute.xlu0 %2526
    %2528 = vrot.lane.b32.xlu0 %v2484, 18
    %v2529 = vpop.permute.xlu0 %2528
    %2530 = vrot.lane.b32.xlu0 %v2485, 18
    %v2531 = vpop.permute.xlu0 %2530
    %2532 = vrot.lane.b32.xlu0 %v2486, 18
    %v2533 = vpop.permute.xlu0 %2532
    %2534 = vrot.lane.b32.xlu0 %v2487, 18
    %v2535 = vpop.permute.xlu0 %2534
    %2536 = vrot.lane.b32.xlu0 %v2488, 18
    %v2537 = vpop.permute.xlu0 %2536
    %2538 = vrot.lane.b32.xlu0 %v2489, 18
    %v2539 = vpop.permute.xlu0 %2538
    %2540 = vrot.lane.b32.xlu0 %v2490, 18
    %v2541 = vpop.permute.xlu0 %2540
    %2542 = vrot.lane.b32.xlu0 %v2491, 18
    %v2543 = vpop.permute.xlu0 %2542
    %2544 = vrot.lane.b32.xlu0 %v2492, 18
    %v2545 = vpop.permute.xlu0 %2544
    %2546 = vrot.lane.b32.xlu0 %v2493, 18
    %v2547 = vpop.permute.xlu0 %2546
    %2548 = vrot.lane.b32.xlu0 %v2494, 18
    %v2549 = vpop.permute.xlu0 %2548
    %2550 = vrot.lane.b32.xlu0 %v2495, 18
    %v2551 = vpop.permute.xlu0 %2550
    %2552 = vrot.lane.b32.xlu0 %v2496, 18
    %v2553 = vpop.permute.xlu0 %2552
    %2554 = vrot.lane.b32.xlu0 %v2497, 18
    %v2555 = vpop.permute.xlu0 %2554
    %2556 = vrot.lane.b32.xlu0 %v2498, 18
    %v2557 = vpop.permute.xlu0 %2556
    %2558 = vrot.lane.b32.xlu0 %v2499, 18
    %v2559 = vpop.permute.xlu0 %2558
    %v2560 = vsel %vm1998, %v2521, %v2523
    %v2561 = vsel %vm1998, %v2523, %v2525
    %v2562 = vsel %vm1998, %v2525, %v2527
    %v2563 = vsel %vm1998, %v2527, %v2529
    %v2564 = vsel %vm1998, %v2531, %v2533
    %v2565 = vsel %vm1998, %v2533, %v2535
    %v2566 = vsel %vm1998, %v2535, %v2537
    %v2567 = vsel %vm1998, %v2537, %v2539
    %v2568 = vsel %vm1998, %v2541, %v2543
    %v2569 = vsel %vm1998, %v2543, %v2545
    %v2570 = vsel %vm1998, %v2545, %v2547
    %v2571 = vsel %vm1998, %v2547, %v2549
    %v2572 = vsel %vm1998, %v2551, %v2553
    %v2573 = vsel %vm1998, %v2553, %v2555
    %v2574 = vsel %vm1998, %v2555, %v2557
    %v2575 = vsel %vm1998, %v2557, %v2559
    %v2600 = vadd.f32 %v2413, %v2521
    %v2601 = vadd.f32 %v2414, %v2560
    %v2602 = vadd.f32 %v2415, %v2561
    %v2603 = vadd.f32 %v2416, %v2562
    %v2604 = vadd.f32 %v2417, %v2563
    %v2605 = vadd.f32 %v2418, %v2529
    %v2606 = vadd.f32 %v2419, %v2531
    %v2607 = vadd.f32 %v2420, %v2564
    %v2608 = vadd.f32 %v2421, %v2565
    %v2609 = vadd.f32 %v2422, %v2566
    %v2610 = vadd.f32 %v2423, %v2567
    %v2611 = vadd.f32 %v2424, %v2539
    %v2612 = vadd.f32 %v2425, %v2541
    %v2613 = vadd.f32 %v2426, %v2568
    %v2614 = vadd.f32 %v2427, %v2569
    %v2615 = vadd.f32 %v2428, %v2570
    %v2616 = vadd.f32 %v2429, %v2571
    %v2617 = vadd.f32 %v2430, %v2549
    %v2618 = vadd.f32 %v2431, %v2551
    %v2619 = vadd.f32 %v2432, %v2572
    %v2620 = vadd.f32 %v2433, %v2573
    %v2621 = vadd.f32 %v2434, %v2574
    %v2622 = vadd.f32 %v2435, %v2575
    %v2623 = vadd.f32 %v2436, %v2559
    %v2624 = vld [vmem:[%s2] sm:$0xff]
    %2626 = vset.pattern.permute.xlu0 0
    %2627 = vperm.xlu0 %2626, %v2624
    %v2628 = vpop.permute.xlu0 %2627
    %v2630 = vadd.f32 %v2600, %v2628
    %v2631 = vadd.f32 %v2601, %v2628
    %v2632 = vadd.f32 %v2602, %v2628
    %v2633 = vadd.f32 %v2603, %v2628
    %v2634 = vadd.f32 %v2604, %v2628
    %v2635 = vadd.f32 %v2605, %v2628
    %v2636 = vadd.f32 %v2606, %v2628
    %v2637 = vadd.f32 %v2607, %v2628
    %v2638 = vadd.f32 %v2608, %v2628
    %v2639 = vadd.f32 %v2609, %v2628
    %v2640 = vadd.f32 %v2610, %v2628
    %v2641 = vadd.f32 %v2611, %v2628
    %v2642 = vadd.f32 %v2612, %v2628
    %v2643 = vadd.f32 %v2613, %v2628
    %v2644 = vadd.f32 %v2614, %v2628
    %v2645 = vadd.f32 %v2615, %v2628
    %v2646 = vadd.f32 %v2616, %v2628
    %v2647 = vadd.f32 %v2617, %v2628
    %v2648 = vadd.f32 %v2618, %v2628
    %v2649 = vadd.f32 %v2619, %v2628
    %v2650 = vadd.f32 %v2620, %v2628
    %v2651 = vadd.f32 %v2621, %v2628
    %v2652 = vadd.f32 %v2622, %v2628
    %v2653 = vadd.f32 %v2623, %v2628
    %v2654 = vld [vmem:[%s5] sm:$0x1f]
    %v2655 = vld [vmem:[%s5 + $0x5] sm:$0x1f]
    %v2656 = vld [vmem:[%s5 + $0xa] sm:$0x1f]
    %v2657 = vld [vmem:[%s5 + $0xf] sm:$0x1f]
    %v2662 = vlaneseq
    %v2663 = vshrl.u32 %v2662, 7
    %v2664 = vsub.s32 0, %v2663
    %v2665 = vrot.slane %v2654, %v2664
    %v2666 = vlaneseq
    %v2667 = vshrl.u32 %v2666, 7
    %v2668 = vsub.s32 1, %v2667
    %v2669 = vrot.slane %v2654, %v2668
    %v2670 = vlaneseq
    %v2671 = vshrl.u32 %v2670, 7
    %v2672 = vsub.s32 2, %v2671
    %v2673 = vrot.slane %v2654, %v2672
    %v2674 = vlaneseq
    %v2675 = vshrl.u32 %v2674, 7
    %v2676 = vsub.s32 3, %v2675
    %v2677 = vrot.slane %v2654, %v2676
    %v2678 = vlaneseq
    %v2679 = vshrl.u32 %v2678, 7
    %v2680 = vsub.s32 4, %v2679
    %v2681 = vrot.slane %v2654, %v2680
    %v2682 = vlaneseq
    %v2683 = vshrl.u32 %v2682, 7
    %v2684 = vsub.s32 0, %v2683
    %v2685 = vrot.slane %v2655, %v2684
    %v2686 = vlaneseq
    %v2687 = vshrl.u32 %v2686, 7
    %v2688 = vsub.s32 1, %v2687
    %v2689 = vrot.slane %v2655, %v2688
    %v2690 = vlaneseq
    %v2691 = vshrl.u32 %v2690, 7
    %v2692 = vsub.s32 2, %v2691
    %v2693 = vrot.slane %v2655, %v2692
    %v2694 = vlaneseq
    %v2695 = vshrl.u32 %v2694, 7
    %v2696 = vsub.s32 3, %v2695
    %v2697 = vrot.slane %v2655, %v2696
    %v2698 = vlaneseq
    %v2699 = vshrl.u32 %v2698, 7
    %v2700 = vsub.s32 4, %v2699
    %v2701 = vrot.slane %v2655, %v2700
    %v2702 = vlaneseq
    %v2703 = vshrl.u32 %v2702, 7
    %v2704 = vsub.s32 0, %v2703
    %v2705 = vrot.slane %v2656, %v2704
    %v2706 = vlaneseq
    %v2707 = vshrl.u32 %v2706, 7
    %v2708 = vsub.s32 1, %v2707
    %v2709 = vrot.slane %v2656, %v2708
    %v2710 = vlaneseq
    %v2711 = vshrl.u32 %v2710, 7
    %v2712 = vsub.s32 2, %v2711
    %v2713 = vrot.slane %v2656, %v2712
    %v2714 = vlaneseq
    %v2715 = vshrl.u32 %v2714, 7
    %v2716 = vsub.s32 3, %v2715
    %v2717 = vrot.slane %v2656, %v2716
    %v2718 = vlaneseq
    %v2719 = vshrl.u32 %v2718, 7
    %v2720 = vsub.s32 4, %v2719
    %v2721 = vrot.slane %v2656, %v2720
    %v2722 = vlaneseq
    %v2723 = vshrl.u32 %v2722, 7
    %v2724 = vsub.s32 0, %v2723
    %v2725 = vrot.slane %v2657, %v2724
    %v2726 = vlaneseq
    %v2727 = vshrl.u32 %v2726, 7
    %v2728 = vsub.s32 1, %v2727
    %v2729 = vrot.slane %v2657, %v2728
    %v2730 = vlaneseq
    %v2731 = vshrl.u32 %v2730, 7
    %v2732 = vsub.s32 2, %v2731
    %v2733 = vrot.slane %v2657, %v2732
    %v2734 = vlaneseq
    %v2735 = vshrl.u32 %v2734, 7
    %v2736 = vsub.s32 3, %v2735
    %v2737 = vrot.slane %v2657, %v2736
    %v2738 = vlaneseq
    %v2739 = vshrl.u32 %v2738, 7
    %v2740 = vsub.s32 4, %v2739
    %v2741 = vrot.slane %v2657, %v2740
    %2742 = vrot.lane.b32.xlu0 %v2665, 18
    %v2743 = vpop.permute.xlu0 %2742
    %2744 = vrot.lane.b32.xlu0 %v2669, 18
    %v2745 = vpop.permute.xlu0 %2744
    %2746 = vrot.lane.b32.xlu0 %v2673, 18
    %v2747 = vpop.permute.xlu0 %2746
    %2748 = vrot.lane.b32.xlu0 %v2677, 18
    %v2749 = vpop.permute.xlu0 %2748
    %2750 = vrot.lane.b32.xlu0 %v2681, 18
    %v2751 = vpop.permute.xlu0 %2750
    %2752 = vrot.lane.b32.xlu0 %v2685, 18
    %v2753 = vpop.permute.xlu0 %2752
    %2754 = vrot.lane.b32.xlu0 %v2689, 18
    %v2755 = vpop.permute.xlu0 %2754
    %2756 = vrot.lane.b32.xlu0 %v2693, 18
    %v2757 = vpop.permute.xlu0 %2756
    %2758 = vrot.lane.b32.xlu0 %v2697, 18
    %v2759 = vpop.permute.xlu0 %2758
    %2760 = vrot.lane.b32.xlu0 %v2701, 18
    %v2761 = vpop.permute.xlu0 %2760
    %2762 = vrot.lane.b32.xlu0 %v2705, 18
    %v2763 = vpop.permute.xlu0 %2762
    %2764 = vrot.lane.b32.xlu0 %v2709, 18
    %v2765 = vpop.permute.xlu0 %2764
    %2766 = vrot.lane.b32.xlu0 %v2713, 18
    %v2767 = vpop.permute.xlu0 %2766
    %2768 = vrot.lane.b32.xlu0 %v2717, 18
    %v2769 = vpop.permute.xlu0 %2768
    %2770 = vrot.lane.b32.xlu0 %v2721, 18
    %v2771 = vpop.permute.xlu0 %2770
    %2772 = vrot.lane.b32.xlu0 %v2725, 18
    %v2773 = vpop.permute.xlu0 %2772
    %2774 = vrot.lane.b32.xlu0 %v2729, 18
    %v2775 = vpop.permute.xlu0 %2774
    %2776 = vrot.lane.b32.xlu0 %v2733, 18
    %v2777 = vpop.permute.xlu0 %2776
    %2778 = vrot.lane.b32.xlu0 %v2737, 18
    %v2779 = vpop.permute.xlu0 %2778
    %2780 = vrot.lane.b32.xlu0 %v2741, 18
    %v2781 = vpop.permute.xlu0 %2780
    %v2782 = vsel %vm1998, %v2743, %v2745
    %v2783 = vsel %vm1998, %v2745, %v2747
    %v2784 = vsel %vm1998, %v2747, %v2749
    %v2785 = vsel %vm1998, %v2749, %v2751
    %v2786 = vsel %vm1998, %v2753, %v2755
    %v2787 = vsel %vm1998, %v2755, %v2757
    %v2788 = vsel %vm1998, %v2757, %v2759
    %v2789 = vsel %vm1998, %v2759, %v2761
    %v2790 = vsel %vm1998, %v2763, %v2765
    %v2791 = vsel %vm1998, %v2765, %v2767
    %v2792 = vsel %vm1998, %v2767, %v2769
    %v2793 = vsel %vm1998, %v2769, %v2771
    %v2794 = vsel %vm1998, %v2773, %v2775
    %v2795 = vsel %vm1998, %v2775, %v2777
    %v2796 = vsel %vm1998, %v2777, %v2779
    %v2797 = vsel %vm1998, %v2779, %v2781
    %v2822 = vmul.f32 %v2630, %v2743
    %v2823 = vmul.f32 %v2631, %v2782
    %v2824 = vmul.f32 %v2632, %v2783
    %v2825 = vmul.f32 %v2633, %v2784
    %v2826 = vmul.f32 %v2634, %v2785
    %v2827 = vmul.f32 %v2635, %v2751
    %v2828 = vmul.f32 %v2636, %v2753
    %v2829 = vmul.f32 %v2637, %v2786
    %v2830 = vmul.f32 %v2638, %v2787
    %v2831 = vmul.f32 %v2639, %v2788
    %v2832 = vmul.f32 %v2640, %v2789
    %v2833 = vmul.f32 %v2641, %v2761
    %v2834 = vmul.f32 %v2642, %v2763
    %v2835 = vmul.f32 %v2643, %v2790
    %v2836 = vmul.f32 %v2644, %v2791
    %v2837 = vmul.f32 %v2645, %v2792
    %v2838 = vmul.f32 %v2646, %v2793
    %v2839 = vmul.f32 %v2647, %v2771
    %v2840 = vmul.f32 %v2648, %v2773
    %v2841 = vmul.f32 %v2649, %v2794
    %v2842 = vmul.f32 %v2650, %v2795
    %v2843 = vmul.f32 %v2651, %v2796
    %v2844 = vmul.f32 %v2652, %v2797
    %v2845 = vmul.f32 %v2653, %v2781
    %2870 = vrot.lane.b32.xlu0 %v2822, 110
    %v2871 = vpop.permute.xlu0 %2870
    %2872 = vrot.lane.b32.xlu0 %v2823, 110
    %v2873 = vpop.permute.xlu0 %2872
    %2874 = vrot.lane.b32.xlu0 %v2824, 110
    %v2875 = vpop.permute.xlu0 %2874
    %2876 = vrot.lane.b32.xlu0 %v2825, 110
    %v2877 = vpop.permute.xlu0 %2876
    %2878 = vrot.lane.b32.xlu0 %v2826, 110
    %v2879 = vpop.permute.xlu0 %2878
    %2880 = vrot.lane.b32.xlu0 %v2827, 110
    %v2881 = vpop.permute.xlu0 %2880
    %2882 = vrot.lane.b32.xlu0 %v2828, 110
    %v2883 = vpop.permute.xlu0 %2882
    %2884 = vrot.lane.b32.xlu0 %v2829, 110
    %v2885 = vpop.permute.xlu0 %2884
    %2886 = vrot.lane.b32.xlu0 %v2830, 110
    %v2887 = vpop.permute.xlu0 %2886
    %2888 = vrot.lane.b32.xlu0 %v2831, 110
    %v2889 = vpop.permute.xlu0 %2888
    %2890 = vrot.lane.b32.xlu0 %v2832, 110
    %v2891 = vpop.permute.xlu0 %2890
    %2892 = vrot.lane.b32.xlu0 %v2833, 110
    %v2893 = vpop.permute.xlu0 %2892
    %2894 = vrot.lane.b32.xlu0 %v2834, 110
    %v2895 = vpop.permute.xlu0 %2894
    %2896 = vrot.lane.b32.xlu0 %v2835, 110
    %v2897 = vpop.permute.xlu0 %2896
    %2898 = vrot.lane.b32.xlu0 %v2836, 110
    %v2899 = vpop.permute.xlu0 %2898
    %2900 = vrot.lane.b32.xlu0 %v2837, 110
    %v2901 = vpop.permute.xlu0 %2900
    %2902 = vrot.lane.b32.xlu0 %v2838, 110
    %v2903 = vpop.permute.xlu0 %2902
    %2904 = vrot.lane.b32.xlu0 %v2839, 110
    %v2905 = vpop.permute.xlu0 %2904
    %2906 = vrot.lane.b32.xlu0 %v2840, 110
    %v2907 = vpop.permute.xlu0 %2906
    %2908 = vrot.lane.b32.xlu0 %v2841, 110
    %v2909 = vpop.permute.xlu0 %2908
    %2910 = vrot.lane.b32.xlu0 %v2842, 110
    %v2911 = vpop.permute.xlu0 %2910
    %2912 = vrot.lane.b32.xlu0 %v2843, 110
    %v2913 = vpop.permute.xlu0 %2912
    %2914 = vrot.lane.b32.xlu0 %v2844, 110
    %v2915 = vpop.permute.xlu0 %2914
    %2916 = vrot.lane.b32.xlu0 %v2845, 110
    %v2917 = vpop.permute.xlu0 %2916
    %vm2918 = vcmask 900096
    %v2919 = vsel %vm2918, %v2871, %v2873
    %v2920 = vsel %vm2918, %v2873, %v2875
    %v2921 = vsel %vm2918, %v2875, %v2877
    %v2922 = vsel %vm2918, %v2877, %v2879
    %v2923 = vsel %vm2918, %v2879, %v2881
    %v2924 = vsel %vm2918, %v2883, %v2885
    %v2925 = vsel %vm2918, %v2885, %v2887
    %v2926 = vsel %vm2918, %v2887, %v2889
    %v2927 = vsel %vm2918, %v2889, %v2891
    %v2928 = vsel %vm2918, %v2891, %v2893
    %v2929 = vsel %vm2918, %v2895, %v2897
    %v2930 = vsel %vm2918, %v2897, %v2899
    %v2931 = vsel %vm2918, %v2899, %v2901
    %v2932 = vsel %vm2918, %v2901, %v2903
    %v2933 = vsel %vm2918, %v2903, %v2905
    %v2934 = vsel %vm2918, %v2907, %v2909
    %v2935 = vsel %vm2918, %v2909, %v2911
    %v2936 = vsel %vm2918, %v2911, %v2913
    %v2937 = vsel %vm2918, %v2913, %v2915
    %v2938 = vsel %vm2918, %v2915, %v2917
    %v2959 = vadd.f32 %v2919, %v2920
    %v2960 = vadd.f32 %v2959, %v2921
    %v2961 = vadd.f32 %v2960, %v2922
    %v2962 = vadd.f32 %v2961, %v2923
    %2963 = vadd.xlane.f32.xlu0 %v2962
    %v2964 = vpop.xlane.xlu0 %2963
    %v2965 = vadd.f32 %v2924, %v2925
    %v2966 = vadd.f32 %v2965, %v2926
    %v2967 = vadd.f32 %v2966, %v2927
    %v2968 = vadd.f32 %v2967, %v2928
    %2969 = vadd.xlane.f32.xlu0 %v2968
    %v2970 = vpop.xlane.xlu0 %2969
    %v2971 = vadd.f32 %v2929, %v2930
    %v2972 = vadd.f32 %v2971, %v2931
    %v2973 = vadd.f32 %v2972, %v2932
    %v2974 = vadd.f32 %v2973, %v2933
    %2975 = vadd.xlane.f32.xlu0 %v2974
    %v2976 = vpop.xlane.xlu0 %2975
    %v2977 = vadd.f32 %v2934, %v2935
    %v2978 = vadd.f32 %v2977, %v2936
    %v2979 = vadd.f32 %v2978, %v2937
    %v2980 = vadd.f32 %v2979, %v2938
    %2981 = vadd.xlane.f32.xlu0 %v2980
    %v2982 = vpop.xlane.xlu0 %2981
    %v2983 = vadd.f32 %v2964, %v2970
    %v2984 = vadd.f32 %v2983, %v2976
    %v2985 = vadd.f32 %v2984, %v2982
    %v2986 = vmul.f32 %v2985, 0.0005202914
    %v2987 = vmul.f32 %v2822, %v2630
    %v2988 = vmul.f32 %v2823, %v2631
    %v2989 = vmul.f32 %v2824, %v2632
    %v2990 = vmul.f32 %v2825, %v2633
    %v2991 = vmul.f32 %v2826, %v2634
    %v2992 = vmul.f32 %v2827, %v2635
    %v2993 = vmul.f32 %v2828, %v2636
    %v2994 = vmul.f32 %v2829, %v2637
    %v2995 = vmul.f32 %v2830, %v2638
    %v2996 = vmul.f32 %v2831, %v2639
    %v2997 = vmul.f32 %v2832, %v2640
    %v2998 = vmul.f32 %v2833, %v2641
    %v2999 = vmul.f32 %v2834, %v2642
    %v3000 = vmul.f32 %v2835, %v2643
    %v3001 = vmul.f32 %v2836, %v2644
    %v3002 = vmul.f32 %v2837, %v2645
    %v3003 = vmul.f32 %v2838, %v2646
    %v3004 = vmul.f32 %v2839, %v2647
    %v3005 = vmul.f32 %v2840, %v2648
    %v3006 = vmul.f32 %v2841, %v2649
    %v3007 = vmul.f32 %v2842, %v2650
    %v3008 = vmul.f32 %v2843, %v2651
    %v3009 = vmul.f32 %v2844, %v2652
    %v3010 = vmul.f32 %v2845, %v2653
    %3035 = vrot.lane.b32.xlu0 %v2987, 110
    %v3036 = vpop.permute.xlu0 %3035
    %3037 = vrot.lane.b32.xlu0 %v2988, 110
    %v3038 = vpop.permute.xlu0 %3037
    %3039 = vrot.lane.b32.xlu0 %v2989, 110
    %v3040 = vpop.permute.xlu0 %3039
    %3041 = vrot.lane.b32.xlu0 %v2990, 110
    %v3042 = vpop.permute.xlu0 %3041
    %3043 = vrot.lane.b32.xlu0 %v2991, 110
    %v3044 = vpop.permute.xlu0 %3043
    %3045 = vrot.lane.b32.xlu0 %v2992, 110
    %v3046 = vpop.permute.xlu0 %3045
    %3047 = vrot.lane.b32.xlu0 %v2993, 110
    %v3048 = vpop.permute.xlu0 %3047
    %3049 = vrot.lane.b32.xlu0 %v2994, 110
    %v3050 = vpop.permute.xlu0 %3049
    %3051 = vrot.lane.b32.xlu0 %v2995, 110
    %v3052 = vpop.permute.xlu0 %3051
    %3053 = vrot.lane.b32.xlu0 %v2996, 110
    %v3054 = vpop.permute.xlu0 %3053
    %3055 = vrot.lane.b32.xlu0 %v2997, 110
    %v3056 = vpop.permute.xlu0 %3055
    %3057 = vrot.lane.b32.xlu0 %v2998, 110
    %v3058 = vpop.permute.xlu0 %3057
    %3059 = vrot.lane.b32.xlu0 %v2999, 110
    %v3060 = vpop.permute.xlu0 %3059
    %3061 = vrot.lane.b32.xlu0 %v3000, 110
    %v3062 = vpop.permute.xlu0 %3061
    %3063 = vrot.lane.b32.xlu0 %v3001, 110
    %v3064 = vpop.permute.xlu0 %3063
    %3065 = vrot.lane.b32.xlu0 %v3002, 110
    %v3066 = vpop.permute.xlu0 %3065
    %3067 = vrot.lane.b32.xlu0 %v3003, 110
    %v3068 = vpop.permute.xlu0 %3067
    %3069 = vrot.lane.b32.xlu0 %v3004, 110
    %v3070 = vpop.permute.xlu0 %3069
    %3071 = vrot.lane.b32.xlu0 %v3005, 110
    %v3072 = vpop.permute.xlu0 %3071
    %3073 = vrot.lane.b32.xlu0 %v3006, 110
    %v3074 = vpop.permute.xlu0 %3073
    %3075 = vrot.lane.b32.xlu0 %v3007, 110
    %v3076 = vpop.permute.xlu0 %3075
    %3077 = vrot.lane.b32.xlu0 %v3008, 110
    %v3078 = vpop.permute.xlu0 %3077
    %3079 = vrot.lane.b32.xlu0 %v3009, 110
    %v3080 = vpop.permute.xlu0 %3079
    %3081 = vrot.lane.b32.xlu0 %v3010, 110
    %v3082 = vpop.permute.xlu0 %3081
    %v3083 = vsel %vm2918, %v3036, %v3038
    %v3084 = vsel %vm2918, %v3038, %v3040
    %v3085 = vsel %vm2918, %v3040, %v3042
    %v3086 = vsel %vm2918, %v3042, %v3044
    %v3087 = vsel %vm2918, %v3044, %v3046
    %v3088 = vsel %vm2918, %v3048, %v3050
    %v3089 = vsel %vm2918, %v3050, %v3052
    %v3090 = vsel %vm2918, %v3052, %v3054
    %v3091 = vsel %vm2918, %v3054, %v3056
    %v3092 = vsel %vm2918, %v3056, %v3058
    %v3093 = vsel %vm2918, %v3060, %v3062
    %v3094 = vsel %vm2918, %v3062, %v3064
    %v3095 = vsel %vm2918, %v3064, %v3066
    %v3096 = vsel %vm2918, %v3066, %v3068
    %v3097 = vsel %vm2918, %v3068, %v3070
    %v3098 = vsel %vm2918, %v3072, %v3074
    %v3099 = vsel %vm2918, %v3074, %v3076
    %v3100 = vsel %vm2918, %v3076, %v3078
    %v3101 = vsel %vm2918, %v3078, %v3080
    %v3102 = vsel %vm2918, %v3080, %v3082
    %v3123 = vadd.f32 %v3083, %v3084
    %v3124 = vadd.f32 %v3123, %v3085
    %v3125 = vadd.f32 %v3124, %v3086
    %v3126 = vadd.f32 %v3125, %v3087
    %3127 = vadd.xlane.f32.xlu0 %v3126
    %v3128 = vpop.xlane.xlu0 %3127
    %v3129 = vadd.f32 %v3088, %v3089
    %v3130 = vadd.f32 %v3129, %v3090
    %v3131 = vadd.f32 %v3130, %v3091
    %v3132 = vadd.f32 %v3131, %v3092
    %3133 = vadd.xlane.f32.xlu0 %v3132
    %v3134 = vpop.xlane.xlu0 %3133
    %v3135 = vadd.f32 %v3093, %v3094
    %v3136 = vadd.f32 %v3135, %v3095
    %v3137 = vadd.f32 %v3136, %v3096
    %v3138 = vadd.f32 %v3137, %v3097
    %3139 = vadd.xlane.f32.xlu0 %v3138
    %v3140 = vpop.xlane.xlu0 %3139
    %v3141 = vadd.f32 %v3098, %v3099
    %v3142 = vadd.f32 %v3141, %v3100
    %v3143 = vadd.f32 %v3142, %v3101
    %v3144 = vadd.f32 %v3143, %v3102
    %3145 = vadd.xlane.f32.xlu0 %v3144
    %v3146 = vpop.xlane.xlu0 %3145
    %v3147 = vadd.f32 %v3128, %v3134
    %v3148 = vadd.f32 %v3147, %v3140
    %v3149 = vadd.f32 %v3148, %v3146
    %v3150 = vmul.f32 %v3149, 0.0005202914
    %v3151 = vmul.f32 %v2986, %v2986
    %v3152 = vsub.f32 %v3150, %v3151
    %v3153 = vadd.f32 %v3152, 1e-05
    %v3154 = vrsqrt.pop %v3153
    %v3155 = vld [vmem:[%s3] sm:$0xff]
    %v3156 = vmul.f32 %v3154, %v3155
    %v3157 = vld [vmem:[%s4] sm:$0xff]
    %v3158 = vmul.f32 %v2986, %v3156
    %v3159 = vsub.f32 %v3157, %v3158
    %3161 = vset.pattern.permute.xlu0 0
    %3162 = vperm.xlu0 %3161, %v3156
    %v3163 = vpop.permute.xlu0 %3162
    %v3165 = vmul.f32 %v2630, %v3163
    %v3166 = vmul.f32 %v2631, %v3163
    %v3167 = vmul.f32 %v2632, %v3163
    %v3168 = vmul.f32 %v2633, %v3163
    %v3169 = vmul.f32 %v2634, %v3163
    %v3170 = vmul.f32 %v2635, %v3163
    %v3171 = vmul.f32 %v2636, %v3163
    %v3172 = vmul.f32 %v2637, %v3163
    %v3173 = vmul.f32 %v2638, %v3163
    %v3174 = vmul.f32 %v2639, %v3163
    %v3175 = vmul.f32 %v2640, %v3163
    %v3176 = vmul.f32 %v2641, %v3163
    %v3177 = vmul.f32 %v2642, %v3163
    %v3178 = vmul.f32 %v2643, %v3163
    %v3179 = vmul.f32 %v2644, %v3163
    %v3180 = vmul.f32 %v2645, %v3163
    %v3181 = vmul.f32 %v2646, %v3163
    %v3182 = vmul.f32 %v2647, %v3163
    %v3183 = vmul.f32 %v2648, %v3163
    %v3184 = vmul.f32 %v2649, %v3163
    %v3185 = vmul.f32 %v2650, %v3163
    %v3186 = vmul.f32 %v2651, %v3163
    %v3187 = vmul.f32 %v2652, %v3163
    %v3188 = vmul.f32 %v2653, %v3163
    %3190 = vset.pattern.permute.xlu0 0
    %3191 = vperm.xlu0 %3190, %v3159
    %v3192 = vpop.permute.xlu0 %3191
    %v3194 = vadd.f32 %v3165, %v3192
    %v3195 = vadd.f32 %v3166, %v3192
    %v3196 = vadd.f32 %v3167, %v3192
    %v3197 = vadd.f32 %v3168, %v3192
    %v3198 = vadd.f32 %v3169, %v3192
    %v3199 = vadd.f32 %v3170, %v3192
    %v3200 = vadd.f32 %v3171, %v3192
    %v3201 = vadd.f32 %v3172, %v3192
    %v3202 = vadd.f32 %v3173, %v3192
    %v3203 = vadd.f32 %v3174, %v3192
    %v3204 = vadd.f32 %v3175, %v3192
    %v3205 = vadd.f32 %v3176, %v3192
    %v3206 = vadd.f32 %v3177, %v3192
    %v3207 = vadd.f32 %v3178, %v3192
    %v3208 = vadd.f32 %v3179, %v3192
    %v3209 = vadd.f32 %v3180, %v3192
    %v3210 = vadd.f32 %v3181, %v3192
    %v3211 = vadd.f32 %v3182, %v3192
    %v3212 = vadd.f32 %v3183, %v3192
    %v3213 = vadd.f32 %v3184, %v3192
    %v3214 = vadd.f32 %v3185, %v3192
    %v3215 = vadd.f32 %v3186, %v3192
    %v3216 = vadd.f32 %v3187, %v3192
    %v3217 = vadd.f32 %v3188, %v3192
    %vm3218 = vcmp.ge.f32.partialorder %v3194, 0.0
    %vm3219 = vcmp.ge.f32.partialorder %v3195, 0.0
    %vm3220 = vcmp.ge.f32.partialorder %v3196, 0.0
    %vm3221 = vcmp.ge.f32.partialorder %v3197, 0.0
    %vm3222 = vcmp.ge.f32.partialorder %v3198, 0.0
    %vm3223 = vcmp.ge.f32.partialorder %v3199, 0.0
    %vm3224 = vcmp.ge.f32.partialorder %v3200, 0.0
    %vm3225 = vcmp.ge.f32.partialorder %v3201, 0.0
    %vm3226 = vcmp.ge.f32.partialorder %v3202, 0.0
    %vm3227 = vcmp.ge.f32.partialorder %v3203, 0.0
    %vm3228 = vcmp.ge.f32.partialorder %v3204, 0.0
    %vm3229 = vcmp.ge.f32.partialorder %v3205, 0.0
    %vm3230 = vcmp.ge.f32.partialorder %v3206, 0.0
    %vm3231 = vcmp.ge.f32.partialorder %v3207, 0.0
    %vm3232 = vcmp.ge.f32.partialorder %v3208, 0.0
    %vm3233 = vcmp.ge.f32.partialorder %v3209, 0.0
    %vm3234 = vcmp.ge.f32.partialorder %v3210, 0.0
    %vm3235 = vcmp.ge.f32.partialorder %v3211, 0.0
    %vm3236 = vcmp.ge.f32.partialorder %v3212, 0.0
    %vm3237 = vcmp.ge.f32.partialorder %v3213, 0.0
    %vm3238 = vcmp.ge.f32.partialorder %v3214, 0.0
    %vm3239 = vcmp.ge.f32.partialorder %v3215, 0.0
    %vm3240 = vcmp.ge.f32.partialorder %v3216, 0.0
    %vm3241 = vcmp.ge.f32.partialorder %v3217, 0.0
    %v3242 = vmul.f32 %v3194, 0.01
    %v3243 = vmul.f32 %v3195, 0.01
    %v3244 = vmul.f32 %v3196, 0.01
    %v3245 = vmul.f32 %v3197, 0.01
    %v3246 = vmul.f32 %v3198, 0.01
    %v3247 = vmul.f32 %v3199, 0.01
    %v3248 = vmul.f32 %v3200, 0.01
    %v3249 = vmul.f32 %v3201, 0.01
    %v3250 = vmul.f32 %v3202, 0.01
    %v3251 = vmul.f32 %v3203, 0.01
    %v3252 = vmul.f32 %v3204, 0.01
    %v3253 = vmul.f32 %v3205, 0.01
    %v3254 = vmul.f32 %v3206, 0.01
    %v3255 = vmul.f32 %v3207, 0.01
    %v3256 = vmul.f32 %v3208, 0.01
    %v3257 = vmul.f32 %v3209, 0.01
    %v3258 = vmul.f32 %v3210, 0.01
    %v3259 = vmul.f32 %v3211, 0.01
    %v3260 = vmul.f32 %v3212, 0.01
    %v3261 = vmul.f32 %v3213, 0.01
    %v3262 = vmul.f32 %v3214, 0.01
    %v3263 = vmul.f32 %v3215, 0.01
    %v3264 = vmul.f32 %v3216, 0.01
    %v3265 = vmul.f32 %v3217, 0.01
    %v3266 = vsel %vm3218, %v3194, %v3242
    %v3267 = vsel %vm3219, %v3195, %v3243
    %v3268 = vsel %vm3220, %v3196, %v3244
    %v3269 = vsel %vm3221, %v3197, %v3245
    %v3270 = vsel %vm3222, %v3198, %v3246
    %v3271 = vsel %vm3223, %v3199, %v3247
    %v3272 = vsel %vm3224, %v3200, %v3248
    %v3273 = vsel %vm3225, %v3201, %v3249
    %v3274 = vsel %vm3226, %v3202, %v3250
    %v3275 = vsel %vm3227, %v3203, %v3251
    %v3276 = vsel %vm3228, %v3204, %v3252
    %v3277 = vsel %vm3229, %v3205, %v3253
    %v3278 = vsel %vm3230, %v3206, %v3254
    %v3279 = vsel %vm3231, %v3207, %v3255
    %v3280 = vsel %vm3232, %v3208, %v3256
    %v3281 = vsel %vm3233, %v3209, %v3257
    %v3282 = vsel %vm3234, %v3210, %v3258
    %v3283 = vsel %vm3235, %v3211, %v3259
    %v3284 = vsel %vm3236, %v3212, %v3260
    %v3285 = vsel %vm3237, %v3213, %v3261
    %v3286 = vsel %vm3238, %v3214, %v3262
    %v3287 = vsel %vm3239, %v3215, %v3263
    %v3288 = vsel %vm3240, %v3216, %v3264
    %v3289 = vsel %vm3241, %v3217, %v3265
    %3314 = vrot.lane.b32.xlu0 %v3266, 110
    %v3315 = vpop.permute.xlu0 %3314
    %3316 = vrot.lane.b32.xlu0 %v3267, 110
    %v3317 = vpop.permute.xlu0 %3316
    %3318 = vrot.lane.b32.xlu0 %v3268, 110
    %v3319 = vpop.permute.xlu0 %3318
    %3320 = vrot.lane.b32.xlu0 %v3269, 110
    %v3321 = vpop.permute.xlu0 %3320
    %3322 = vrot.lane.b32.xlu0 %v3270, 110
    %v3323 = vpop.permute.xlu0 %3322
    %3324 = vrot.lane.b32.xlu0 %v3271, 110
    %v3325 = vpop.permute.xlu0 %3324
    %3326 = vrot.lane.b32.xlu0 %v3272, 110
    %v3327 = vpop.permute.xlu0 %3326
    %3328 = vrot.lane.b32.xlu0 %v3273, 110
    %v3329 = vpop.permute.xlu0 %3328
    %3330 = vrot.lane.b32.xlu0 %v3274, 110
    %v3331 = vpop.permute.xlu0 %3330
    %3332 = vrot.lane.b32.xlu0 %v3275, 110
    %v3333 = vpop.permute.xlu0 %3332
    %3334 = vrot.lane.b32.xlu0 %v3276, 110
    %v3335 = vpop.permute.xlu0 %3334
    %3336 = vrot.lane.b32.xlu0 %v3277, 110
    %v3337 = vpop.permute.xlu0 %3336
    %3338 = vrot.lane.b32.xlu0 %v3278, 110
    %v3339 = vpop.permute.xlu0 %3338
    %3340 = vrot.lane.b32.xlu0 %v3279, 110
    %v3341 = vpop.permute.xlu0 %3340
    %3342 = vrot.lane.b32.xlu0 %v3280, 110
    %v3343 = vpop.permute.xlu0 %3342
    %3344 = vrot.lane.b32.xlu0 %v3281, 110
    %v3345 = vpop.permute.xlu0 %3344
    %3346 = vrot.lane.b32.xlu0 %v3282, 110
    %v3347 = vpop.permute.xlu0 %3346
    %3348 = vrot.lane.b32.xlu0 %v3283, 110
    %v3349 = vpop.permute.xlu0 %3348
    %3350 = vrot.lane.b32.xlu0 %v3284, 110
    %v3351 = vpop.permute.xlu0 %3350
    %3352 = vrot.lane.b32.xlu0 %v3285, 110
    %v3353 = vpop.permute.xlu0 %3352
    %3354 = vrot.lane.b32.xlu0 %v3286, 110
    %v3355 = vpop.permute.xlu0 %3354
    %3356 = vrot.lane.b32.xlu0 %v3287, 110
    %v3357 = vpop.permute.xlu0 %3356
    %3358 = vrot.lane.b32.xlu0 %v3288, 110
    %v3359 = vpop.permute.xlu0 %3358
    %3360 = vrot.lane.b32.xlu0 %v3289, 110
    %v3361 = vpop.permute.xlu0 %3360
    %v3362 = vsel %vm2918, %v3315, %v3317
    %v3363 = vsel %vm2918, %v3317, %v3319
    %v3364 = vsel %vm2918, %v3319, %v3321
    %v3365 = vsel %vm2918, %v3321, %v3323
    %v3366 = vsel %vm2918, %v3323, %v3325
    %v3367 = vsel %vm2918, %v3327, %v3329
    %v3368 = vsel %vm2918, %v3329, %v3331
    %v3369 = vsel %vm2918, %v3331, %v3333
    %v3370 = vsel %vm2918, %v3333, %v3335
    %v3371 = vsel %vm2918, %v3335, %v3337
    %v3372 = vsel %vm2918, %v3339, %v3341
    %v3373 = vsel %vm2918, %v3341, %v3343
    %v3374 = vsel %vm2918, %v3343, %v3345
    %v3375 = vsel %vm2918, %v3345, %v3347
    %v3376 = vsel %vm2918, %v3347, %v3349
    %v3377 = vsel %vm2918, %v3351, %v3353
    %v3378 = vsel %vm2918, %v3353, %v3355
    %v3379 = vsel %vm2918, %v3355, %v3357
    %v3380 = vsel %vm2918, %v3357, %v3359
    %v3381 = vsel %vm2918, %v3359, %v3361
    %3402 = vst [vmem:[#allocation5] sm:$0xff] %v3362
    %3403 = vst [vmem:[#allocation5 + $0x8] sm:$0xff] %v3363
    %3404 = vst [vmem:[#allocation5 + $0x10] sm:$0xff] %v3364
    %3405 = vst [vmem:[#allocation5 + $0x18] sm:$0xff] %v3365
    %3406 = vst [vmem:[#allocation5 + $0x20] sm:$0xff] %v3366
    %3407 = vst [vmem:[#allocation5 + $0x28] sm:$0xff] %v3367
    %3408 = vst [vmem:[#allocation5 + $0x30] sm:$0xff] %v3368
    %3409 = vst [vmem:[#allocation5 + $0x38] sm:$0xff] %v3369
    %3410 = vst [vmem:[#allocation5 + $0x40] sm:$0xff] %v3370
    %3411 = vst [vmem:[#allocation5 + $0x48] sm:$0xff] %v3371
    %3412 = vst [vmem:[#allocation5 + $0x50] sm:$0xff] %v3372
    %3413 = vst [vmem:[#allocation5 + $0x58] sm:$0xff] %v3373
    %3414 = vst [vmem:[#allocation5 + $0x60] sm:$0xff] %v3374
    %3415 = vst [vmem:[#allocation5 + $0x68] sm:$0xff] %v3375
    %3416 = vst [vmem:[#allocation5 + $0x70] sm:$0xff] %v3376
    %3417 = vst [vmem:[#allocation5 + $0x78] sm:$0xff] %v3377
    %3418 = vst [vmem:[#allocation5 + $0x80] sm:$0xff] %v3378
    %3419 = vst [vmem:[#allocation5 + $0x88] sm:$0xff] %v3379
    %3420 = vst [vmem:[#allocation5 + $0x90] sm:$0xff] %v3380
    %3421 = vst [vmem:[#allocation5 + $0x98] sm:$0xff] %v3381
    // Predicated region
    $region30: #{tpu_custom_call.1} parent=1 // pred_check
      _
    $region31: #{tpu_custom_call.1} parent=1 // pred_check_branch
      %3423 = sbr.rel (0) target = $region33
    $region32: #{tpu_custom_call.1} parent=1 // pred_region
      %s3425 = ssub.s32 2560, 2560
      %3426 = vsyncadd [#allocation4], %s3425
      %s3427 = sshll.u32 [#allocation5], 4
      %s3428 = int_to_ptr.vmem [resolvable:$true] %s3427
      %3433 = dma.vmem_to_hbm [thread:$0]  %s3428, 2560, %s6, [#allocation4], 640, 640, 40
    $region33: #{tpu_custom_call.1} parent=1 // pred_fallthru
      _
    // Predicated region
    $region34: #{tpu_custom_call.1} parent=1 // pred_check
      _
    $region35: #{tpu_custom_call.1} parent=1 // pred_check_branch
      %3435 = sbr.rel (0) target = $region37
    $region36: #{tpu_custom_call.1} parent=1 // pred_region
      %3436 = dma.done [#allocation4], 2560
    $region37: #{tpu_custom_call.1} parent=1 // pred_fallthru
      _
    %3437 = vsyncpa [#allocation3], 1
    %3438 = vsyncpa [#allocation4], 1

</llo_original>
